<compile_context>
chip_gen: v6e
topology: v6e:2x2x1
jax: 0.10.0
libtpu: 0.0.40
codegen_flags: <defaults>
</compile_context>

<pallas_src>
import jax
import jax.numpy as jnp
from jax import lax
from jax.experimental import pallas as pl
from jax.experimental.pallas import tpu as pltpu


# ---- module hyperparameters (match the PyTorch spec) -----------------------
EMBED_DIM = 10
HIDDEN_DIM = 16

DATA = [
    'the cat sat on the mat',
    'the dog ate my homework',
    'a bird flew over the house',
    'she read a good book today',
]
VOCAB = sorted(set(' '.join(DATA).split()))
VOCAB_SIZE = len(VOCAB)

LANE = 128  # TPU lane width


# ---- kernel -----------------------------------------------------------------
def _rnn_attn_kernel(tok_ref, embproj_ref, whh_ref, brnn_ref, wattn_ref,
                     wfc_ref, bfc_ref, out_ref):
    # tok_ref    : (1, T, TILE_B, 1) int32 token ids, t-major within the tile
    # embproj_ref: (V, H)   folded embedding * RNN input projection (emb @ W_ih)
    # whh_ref    : (H, H)   RNN recurrent weights (already (in, out) layout)
    # brnn_ref   : (1, H)   b_ih + b_hh
    # wattn_ref  : (1, H)   attention projection (row layout for VPU score)
    # wfc_ref    : (H, 128) classifier, zero-padded to 128 lanes
    # bfc_ref    : (1, 128) classifier bias, zero-padded
    # out_ref    : (TILE_B, 128) padded logits (lane-dense store)
    t_len, bt = tok_ref.shape[1], tok_ref.shape[2]
    v, h_dim = embproj_ref.shape

    toks = tok_ref[0]                                               # (T, Bt, 1)

    # One-hot for ALL time steps at once; rows are t-major (r = t*Bt + b), so
    # step t is the contiguous sublane-aligned slice [t*Bt : (t+1)*Bt].
    lane_v = lax.broadcasted_iota(jnp.int32, (t_len, bt, v), 2)     # (T, Bt, V)
    one_hot = (lane_v == toks).astype(jnp.float32)                  # (T, Bt, V)
    one_hot2 = one_hot.reshape(t_len * bt, v)                       # (T*Bt, V)

    # Single batched input projection on the MXU (replaces T tiny matmuls).
    x_proj = jnp.dot(one_hot2, embproj_ref[...],
                     preferred_element_type=jnp.float32)            # (T*Bt, H)

    w_hh = whh_ref[...]
    b_rnn = brnn_ref[...]                                           # (1, H)
    w_attn = wattn_ref[...]                                         # (1, H)

    # Online-softmax attention accumulation: live state is {h, m, l, acc}
    # regardless of T, so tile_b can be raised without vreg spills.
    h = jnp.zeros((bt, h_dim), jnp.float32)
    m = jnp.full((bt, 1), -1e30, jnp.float32)
    l = jnp.zeros((bt, 1), jnp.float32)
    acc = jnp.zeros((bt, h_dim), jnp.float32)

    # T is a small static constant -> fully unrolled recurrence.
    for t in range(t_len):
        x_t = x_proj[t * bt:(t + 1) * bt, :]                        # (Bt, H)
        h = jnp.tanh(x_t + b_rnn +
                     jnp.dot(h, w_hh, preferred_element_type=jnp.float32))
        # Attention score: VPU multiply + lane reduce (no N=1 MXU pops).
        # The constant attention bias is dropped: softmax is shift-invariant.
        s = jnp.sum(h * w_attn, axis=-1, keepdims=True)             # (Bt, 1)
        m_new = jnp.maximum(m, s)
        alpha = jnp.exp(m - m_new)
        p = jnp.exp(s - m_new)
        l = alpha * l + p
        acc = alpha * acc + p * h
        m = m_new

    # Normalize once, after the loop.
    context = acc * pl.reciprocal(l, approx=False)                  # (Bt, H)

    logits = jnp.dot(context, wfc_ref[...],
                     preferred_element_type=jnp.float32) + bfc_ref[...]
    out_ref[...] = logits.astype(out_ref.dtype)                     # (Bt, 128)


# ---- wrapper ----------------------------------------------------------------
def _pick_tile_b(b):
    # Prefer an even grid of two tiles (keeps both TensorCores busy on v7x)
    # while each tile's sublane count stays a multiple of 8; otherwise one
    # tile (grid=1) to minimize per-grid-step overhead on single-TC chips.
    if b >= 16 and b % 16 == 0:
        return b // 2
    return b


def rnn_with_attention_forward(tokens, kparams, *, tile_b=None):
    """tokens: (B, T) int32.  kparams: pre-folded / pre-padded kernel params."""
    emb_proj, w_hh, b_rnn, w_attn_row, w_fc_pad, b_fc_pad = kparams
    b, t_len = tokens.shape
    v, h = emb_proj.shape
    v_pad = w_fc_pad.shape[1]

    if tile_b is None:
        tile_b = _pick_tile_b(b)
    assert b % tile_b == 0 and tile_b % 8 == 0, \
        "batch must split into tiles whose size is a multiple of 8"
    n_tiles = b // tile_b

    # One-off layout plumbing (tiny int array, not on the weight hot path):
    # tokens -> (n_tiles, T, tile_b, 1), t-major per tile, trailing singleton
    # lane so the kernel never relayouts lanes into sublanes.
    tok4 = tokens.astype(jnp.int32).reshape(n_tiles, tile_b, t_len)
    tok4 = jnp.swapaxes(tok4, 1, 2)[..., None]                      # (n, T, Bt, 1)

    out_padded = pl.pallas_call(
        _rnn_attn_kernel,
        out_shape=jax.ShapeDtypeStruct((b, v_pad), jnp.float32),
        grid_spec=pltpu.PrefetchScalarGridSpec(
            num_scalar_prefetch=0,
            grid=(n_tiles,),
            in_specs=[
                # tokens: tiled over batch (block == full extent on last 2 dims)
                pl.BlockSpec((1, t_len, tile_b, 1), lambda i: (i, 0, 0, 0)),
                # weights: constant index maps -> VMEM-resident across tiles
                pl.BlockSpec((v, h), lambda i: (0, 0)),
                pl.BlockSpec((h, h), lambda i: (0, 0)),
                pl.BlockSpec((1, h), lambda i: (0, 0)),
                pl.BlockSpec((1, h), lambda i: (0, 0)),
                pl.BlockSpec((h, v_pad), lambda i: (0, 0)),
                pl.BlockSpec((1, v_pad), lambda i: (0, 0)),
            ],
            # lane-dense (128-wide) output store
            out_specs=pl.BlockSpec((tile_b, v_pad), lambda i: (i, 0)),
        ),
        compiler_params=pltpu.CompilerParams(
            # batch tiles are independent -> shard across TCs (2 TCs on v7x)
            dimension_semantics=("parallel",)),
    )(tok4, emb_proj, w_hh, b_rnn, w_attn_row, w_fc_pad, b_fc_pad)

    return out_padded[:, :v]


# ---- one-time parameter preparation (fold + pad; NOT on the per-call path) ---
def prepare_kernel_params(params):
    emb, w_ih, w_hh, b_rnn, w_attn, b_attn, w_fc, b_fc = params
    h, v = w_fc.shape
    v_pad = max(LANE, ((v + LANE - 1) // LANE) * LANE)

    # Fold embedding table with the RNN input projection (exact: one-hot rows
    # of the lookup copy rows of emb @ W_ih exactly).
    emb_proj = (emb @ w_ih).astype(jnp.float32)                     # (V, H)
    # Attention as a (1, H) row for the in-kernel VPU score; bias dropped
    # because a constant shift is softmax-invariant.
    w_attn_row = w_attn.reshape(1, -1).astype(jnp.float32)          # (1, H)
    # Zero-pad classifier to 128 lanes (numerically inert; sliced off later).
    w_fc_pad = jnp.zeros((h, v_pad), jnp.float32).at[:, :v].set(w_fc)
    b_fc_pad = jnp.zeros((1, v_pad), jnp.float32).at[:, :v].set(b_fc)

    return emb_proj, w_hh.astype(jnp.float32), b_rnn.astype(jnp.float32), \
        w_attn_row, w_fc_pad, b_fc_pad


# ---- parameter init (weights stored directly in (in, out) kernel layout) -----
def init_params(key, vocab_size, embed_dim, hidden_dim):
    ks = jax.random.split(key, 10)
    emb = jax.random.normal(ks[0], (vocab_size, embed_dim), jnp.float32)

    k_rnn = 1.0 / jnp.sqrt(jnp.float32(hidden_dim))
    w_ih = jax.random.uniform(ks[1], (embed_dim, hidden_dim), jnp.float32, -k_rnn, k_rnn)
    w_hh = jax.random.uniform(ks[2], (hidden_dim, hidden_dim), jnp.float32, -k_rnn, k_rnn)
    b_ih = jax.random.uniform(ks[3], (hidden_dim,), jnp.float32, -k_rnn, k_rnn)
    b_hh = jax.random.uniform(ks[4], (hidden_dim,), jnp.float32, -k_rnn, k_rnn)
    b_rnn = (b_ih + b_hh).reshape(1, hidden_dim)

    k_attn = 1.0 / jnp.sqrt(jnp.float32(hidden_dim))
    w_attn = jax.random.uniform(ks[5], (hidden_dim, 1), jnp.float32, -k_attn, k_attn)
    b_attn = jax.random.uniform(ks[6], (1, 1), jnp.float32, -k_attn, k_attn)

    k_fc = 1.0 / jnp.sqrt(jnp.float32(hidden_dim))
    w_fc = jax.random.uniform(ks[7], (hidden_dim, vocab_size), jnp.float32, -k_fc, k_fc)
    b_fc = jax.random.uniform(ks[8], (1, vocab_size), jnp.float32, -k_fc, k_fc)

    return emb, w_ih, w_hh, b_rnn, w_attn, b_attn, w_fc, b_fc


# ---- pure-JAX reference (same math as the PyTorch module) --------------------
def reference_forward(tokens, emb, w_ih, w_hh, b_rnn, w_attn, b_attn, w_fc, b_fc):
    x = emb[tokens]                                       # (B, T, E)
    b, t_len, _ = x.shape
    h_dim = w_hh.shape[0]
    h = jnp.zeros((b, h_dim), jnp.float32)
    outs = []
    for t in range(t_len):
        h = jnp.tanh(x[:, t, :] @ w_ih + b_rnn + h @ w_hh)
        outs.append(h)
    out = jnp.stack(outs, axis=1)                         # (B, T, H)
    scores = (out @ w_attn)[..., 0] + b_attn[0, 0]        # (B, T)
    attn = jax.nn.softmax(scores, axis=1)
    context = jnp.sum(attn[:, :, None] * out, axis=1)     # (B, H)
    return context @ w_fc + b_fc                          # (B, V)


if __name__ == "__main__":
    key = jax.random.PRNGKey(0)
    k_tok, k_par = jax.random.split(key)

    B, T = 16, 8                                          # default: 2 parallel batch tiles of 8
    tokens = jax.random.randint(k_tok, (B, T), 0, VOCAB_SIZE, dtype=jnp.int32)
    params = init_params(k_par, VOCAB_SIZE, EMBED_DIM, HIDDEN_DIM)
    kparams = prepare_kernel_params(params)               # one-time fold + lane padding

    fwd = jax.jit(rnn_with_attention_forward)
    out = jax.block_until_ready(fwd(tokens, kparams))

    ref = reference_forward(tokens, *params)
    assert out.shape == (B, VOCAB_SIZE)
    max_err = float(jnp.max(jnp.abs(out - ref)))
    assert jnp.allclose(out, ref, atol=1e-4, rtol=1e-4), f"max_err={max_err}"

    # TODO(synk): pad_sequences is a data-prep helper (not part of forward);
    # fixed-length T sequences are used here instead.
    print("KERNEL_OK")
</pallas_src>

<mosaic_0001>
module attributes {stable_mosaic.version = 11 : i64} {
  func.func @_rnn_attn_kernel(%arg0: i32, %arg1: memref<1x8x8x1xi32, #tpu.memory_space<vmem>>, %arg2: memref<19x16xf32, #tpu.memory_space<vmem>>, %arg3: memref<16x16xf32, #tpu.memory_space<vmem>>, %arg4: memref<1x16xf32, #tpu.memory_space<vmem>>, %arg5: memref<1x16xf32, #tpu.memory_space<vmem>>, %arg6: memref<16x128xf32, #tpu.memory_space<vmem>>, %arg7: memref<1x128xf32, #tpu.memory_space<vmem>>, %arg8: memref<8x128xf32, #tpu.memory_space<vmem>>) attributes {dimension_semantics = [#tpu.dimension_semantics<parallel>], iteration_bounds = array<i64: 2>, scalar_prefetch = 0 : i64, scratch_operands = 0 : i64, tpu.core_type = #tpu.core_type<tc>, window_params = [{transform_indices = @transform_0, window_bounds = array<i64: 1, 8, 8, 1>}, {pipeline_mode = #tpu.pipeline_mode<synchronous>, transform_indices = @transform_1, window_bounds = array<i64: 19, 16>}, {pipeline_mode = #tpu.pipeline_mode<synchronous>, transform_indices = @transform_2, window_bounds = array<i64: 16, 16>}, {pipeline_mode = #tpu.pipeline_mode<synchronous>, transform_indices = @transform_3, window_bounds = array<i64: 1, 16>}, {pipeline_mode = #tpu.pipeline_mode<synchronous>, transform_indices = @transform_4, window_bounds = array<i64: 1, 16>}, {pipeline_mode = #tpu.pipeline_mode<synchronous>, transform_indices = @transform_5, window_bounds = array<i64: 16, 128>}, {pipeline_mode = #tpu.pipeline_mode<synchronous>, transform_indices = @transform_6, window_bounds = array<i64: 1, 128>}, {transform_indices = @transform_7, window_bounds = array<i64: 8, 128>}]} {
    %c0 = arith.constant 0 : index
    %c0_0 = arith.constant 0 : index
    %c0_1 = arith.constant 0 : index
    %c0_2 = arith.constant 0 : index
    %0 = vector.load %arg1[%c0, %c0_0, %c0_1, %c0_2] : memref<1x8x8x1xi32, #tpu.memory_space<vmem>>, vector<1x8x8x1xi32>
    %1 = vector.shape_cast %0 : vector<1x8x8x1xi32> to vector<8x8x1xi32>
    %2 = tpu.iota {dimensions = array<i32: 2>} : vector<8x8x19xi32>
    %3 = vector.broadcast %1 : vector<8x8x1xi32> to vector<8x8x19xi32>
    %4 = arith.cmpi eq, %2, %3 : vector<8x8x19xi32>
    %5 = arith.extui %4 : vector<8x8x19xi1> to vector<8x8x19xi32>
    %6 = arith.sitofp %5 : vector<8x8x19xi32> to vector<8x8x19xf32>
    %7 = vector.shape_cast %6 : vector<8x8x19xf32> to vector<64x19xf32>
    %c0_3 = arith.constant 0 : index
    %c0_4 = arith.constant 0 : index
    %8 = vector.load %arg2[%c0_3, %c0_4] : memref<19x16xf32, #tpu.memory_space<vmem>>, vector<19x16xf32>
    %cst = arith.constant dense<0.000000e+00> : vector<64x16xf32>
    %9 = tpu.matmul %7, %8, %cst {dimension_numbers = #tpu.dot_dimension_numbers<[1], [0], [0], [1], [0, 0, 1, 1], [], []>} : vector<64x19xf32>, vector<19x16xf32>, vector<64x16xf32> -> vector<64x16xf32>
    %c0_5 = arith.constant 0 : index
    %c0_6 = arith.constant 0 : index
    %10 = vector.load %arg3[%c0_5, %c0_6] : memref<16x16xf32, #tpu.memory_space<vmem>>, vector<16x16xf32>
    %c0_7 = arith.constant 0 : index
    %c0_8 = arith.constant 0 : index
    %11 = vector.load %arg4[%c0_7, %c0_8] : memref<1x16xf32, #tpu.memory_space<vmem>>, vector<1x16xf32>
    %c0_9 = arith.constant 0 : index
    %c0_10 = arith.constant 0 : index
    %12 = vector.load %arg5[%c0_9, %c0_10] : memref<1x16xf32, #tpu.memory_space<vmem>>, vector<1x16xf32>
    %cst_11 = arith.constant 0.000000e+00 : f32
    %13 = vector.broadcast %cst_11 : f32 to vector<8x16xf32>
    %cst_12 = arith.constant -1.000000e+30 : f32
    %14 = vector.broadcast %cst_12 : f32 to vector<8x1xf32>
    %cst_13 = arith.constant 0.000000e+00 : f32
    %15 = vector.broadcast %cst_13 : f32 to vector<8x1xf32>
    %cst_14 = arith.constant 0.000000e+00 : f32
    %16 = vector.broadcast %cst_14 : f32 to vector<8x16xf32>
    %17 = vector.extract_strided_slice %9 {offsets = [0, 0], sizes = [8, 16], strides = [1, 1]} : vector<64x16xf32> to vector<8x16xf32>
    %18 = vector.broadcast %11 : vector<1x16xf32> to vector<8x16xf32>
    %19 = arith.addf %17, %18 : vector<8x16xf32>
    %cst_15 = arith.constant dense<0.000000e+00> : vector<8x16xf32>
    %20 = tpu.matmul %13, %10, %cst_15 {dimension_numbers = #tpu.dot_dimension_numbers<[1], [0], [0], [1], [0, 0, 1, 1], [], []>} : vector<8x16xf32>, vector<16x16xf32>, vector<8x16xf32> -> vector<8x16xf32>
    %21 = arith.addf %19, %20 : vector<8x16xf32>
    %22 = math.tanh %21 : vector<8x16xf32>
    %23 = vector.broadcast %12 : vector<1x16xf32> to vector<8x16xf32>
    %24 = arith.mulf %22, %23 : vector<8x16xf32>
    %cst_16 = arith.constant dense<0.000000e+00> : vector<8xf32>
    %25 = vector.multi_reduction <add>, %24, %cst_16 [1] : vector<8x16xf32> to vector<8xf32>
    %26 = vector.shape_cast %25 : vector<8xf32> to vector<8x1xf32>
    %27 = arith.maximumf %14, %26 : vector<8x1xf32>
    %28 = arith.subf %14, %27 : vector<8x1xf32>
    %29 = math.exp %28 : vector<8x1xf32>
    %30 = arith.subf %26, %27 : vector<8x1xf32>
    %31 = math.exp %30 : vector<8x1xf32>
    %32 = arith.mulf %29, %15 : vector<8x1xf32>
    %33 = arith.addf %32, %31 : vector<8x1xf32>
    %34 = vector.broadcast %29 : vector<8x1xf32> to vector<8x16xf32>
    %35 = arith.mulf %34, %16 : vector<8x16xf32>
    %36 = vector.broadcast %31 : vector<8x1xf32> to vector<8x16xf32>
    %37 = arith.mulf %36, %22 : vector<8x16xf32>
    %38 = arith.addf %35, %37 : vector<8x16xf32>
    %39 = vector.extract_strided_slice %9 {offsets = [8, 0], sizes = [8, 16], strides = [1, 1]} : vector<64x16xf32> to vector<8x16xf32>
    %40 = vector.broadcast %11 : vector<1x16xf32> to vector<8x16xf32>
    %41 = arith.addf %39, %40 : vector<8x16xf32>
    %cst_17 = arith.constant dense<0.000000e+00> : vector<8x16xf32>
    %42 = tpu.matmul %22, %10, %cst_17 {dimension_numbers = #tpu.dot_dimension_numbers<[1], [0], [0], [1], [0, 0, 1, 1], [], []>} : vector<8x16xf32>, vector<16x16xf32>, vector<8x16xf32> -> vector<8x16xf32>
    %43 = arith.addf %41, %42 : vector<8x16xf32>
    %44 = math.tanh %43 : vector<8x16xf32>
    %45 = vector.broadcast %12 : vector<1x16xf32> to vector<8x16xf32>
    %46 = arith.mulf %44, %45 : vector<8x16xf32>
    %cst_18 = arith.constant dense<0.000000e+00> : vector<8xf32>
    %47 = vector.multi_reduction <add>, %46, %cst_18 [1] : vector<8x16xf32> to vector<8xf32>
    %48 = vector.shape_cast %47 : vector<8xf32> to vector<8x1xf32>
    %49 = arith.maximumf %27, %48 : vector<8x1xf32>
    %50 = arith.subf %27, %49 : vector<8x1xf32>
    %51 = math.exp %50 : vector<8x1xf32>
    %52 = arith.subf %48, %49 : vector<8x1xf32>
    %53 = math.exp %52 : vector<8x1xf32>
    %54 = arith.mulf %51, %33 : vector<8x1xf32>
    %55 = arith.addf %54, %53 : vector<8x1xf32>
    %56 = vector.broadcast %51 : vector<8x1xf32> to vector<8x16xf32>
    %57 = arith.mulf %56, %38 : vector<8x16xf32>
    %58 = vector.broadcast %53 : vector<8x1xf32> to vector<8x16xf32>
    %59 = arith.mulf %58, %44 : vector<8x16xf32>
    %60 = arith.addf %57, %59 : vector<8x16xf32>
    %61 = vector.extract_strided_slice %9 {offsets = [16, 0], sizes = [8, 16], strides = [1, 1]} : vector<64x16xf32> to vector<8x16xf32>
    %62 = vector.broadcast %11 : vector<1x16xf32> to vector<8x16xf32>
    %63 = arith.addf %61, %62 : vector<8x16xf32>
    %cst_19 = arith.constant dense<0.000000e+00> : vector<8x16xf32>
    %64 = tpu.matmul %44, %10, %cst_19 {dimension_numbers = #tpu.dot_dimension_numbers<[1], [0], [0], [1], [0, 0, 1, 1], [], []>} : vector<8x16xf32>, vector<16x16xf32>, vector<8x16xf32> -> vector<8x16xf32>
    %65 = arith.addf %63, %64 : vector<8x16xf32>
    %66 = math.tanh %65 : vector<8x16xf32>
    %67 = vector.broadcast %12 : vector<1x16xf32> to vector<8x16xf32>
    %68 = arith.mulf %66, %67 : vector<8x16xf32>
    %cst_20 = arith.constant dense<0.000000e+00> : vector<8xf32>
    %69 = vector.multi_reduction <add>, %68, %cst_20 [1] : vector<8x16xf32> to vector<8xf32>
    %70 = vector.shape_cast %69 : vector<8xf32> to vector<8x1xf32>
    %71 = arith.maximumf %49, %70 : vector<8x1xf32>
    %72 = arith.subf %49, %71 : vector<8x1xf32>
    %73 = math.exp %72 : vector<8x1xf32>
    %74 = arith.subf %70, %71 : vector<8x1xf32>
    %75 = math.exp %74 : vector<8x1xf32>
    %76 = arith.mulf %73, %55 : vector<8x1xf32>
    %77 = arith.addf %76, %75 : vector<8x1xf32>
    %78 = vector.broadcast %73 : vector<8x1xf32> to vector<8x16xf32>
    %79 = arith.mulf %78, %60 : vector<8x16xf32>
    %80 = vector.broadcast %75 : vector<8x1xf32> to vector<8x16xf32>
    %81 = arith.mulf %80, %66 : vector<8x16xf32>
    %82 = arith.addf %79, %81 : vector<8x16xf32>
    %83 = vector.extract_strided_slice %9 {offsets = [24, 0], sizes = [8, 16], strides = [1, 1]} : vector<64x16xf32> to vector<8x16xf32>
    %84 = vector.broadcast %11 : vector<1x16xf32> to vector<8x16xf32>
    %85 = arith.addf %83, %84 : vector<8x16xf32>
    %cst_21 = arith.constant dense<0.000000e+00> : vector<8x16xf32>
    %86 = tpu.matmul %66, %10, %cst_21 {dimension_numbers = #tpu.dot_dimension_numbers<[1], [0], [0], [1], [0, 0, 1, 1], [], []>} : vector<8x16xf32>, vector<16x16xf32>, vector<8x16xf32> -> vector<8x16xf32>
    %87 = arith.addf %85, %86 : vector<8x16xf32>
    %88 = math.tanh %87 : vector<8x16xf32>
    %89 = vector.broadcast %12 : vector<1x16xf32> to vector<8x16xf32>
    %90 = arith.mulf %88, %89 : vector<8x16xf32>
    %cst_22 = arith.constant dense<0.000000e+00> : vector<8xf32>
    %91 = vector.multi_reduction <add>, %90, %cst_22 [1] : vector<8x16xf32> to vector<8xf32>
    %92 = vector.shape_cast %91 : vector<8xf32> to vector<8x1xf32>
    %93 = arith.maximumf %71, %92 : vector<8x1xf32>
    %94 = arith.subf %71, %93 : vector<8x1xf32>
    %95 = math.exp %94 : vector<8x1xf32>
    %96 = arith.subf %92, %93 : vector<8x1xf32>
    %97 = math.exp %96 : vector<8x1xf32>
    %98 = arith.mulf %95, %77 : vector<8x1xf32>
    %99 = arith.addf %98, %97 : vector<8x1xf32>
    %100 = vector.broadcast %95 : vector<8x1xf32> to vector<8x16xf32>
    %101 = arith.mulf %100, %82 : vector<8x16xf32>
    %102 = vector.broadcast %97 : vector<8x1xf32> to vector<8x16xf32>
    %103 = arith.mulf %102, %88 : vector<8x16xf32>
    %104 = arith.addf %101, %103 : vector<8x16xf32>
    %105 = vector.extract_strided_slice %9 {offsets = [32, 0], sizes = [8, 16], strides = [1, 1]} : vector<64x16xf32> to vector<8x16xf32>
    %106 = vector.broadcast %11 : vector<1x16xf32> to vector<8x16xf32>
    %107 = arith.addf %105, %106 : vector<8x16xf32>
    %cst_23 = arith.constant dense<0.000000e+00> : vector<8x16xf32>
    %108 = tpu.matmul %88, %10, %cst_23 {dimension_numbers = #tpu.dot_dimension_numbers<[1], [0], [0], [1], [0, 0, 1, 1], [], []>} : vector<8x16xf32>, vector<16x16xf32>, vector<8x16xf32> -> vector<8x16xf32>
    %109 = arith.addf %107, %108 : vector<8x16xf32>
    %110 = math.tanh %109 : vector<8x16xf32>
    %111 = vector.broadcast %12 : vector<1x16xf32> to vector<8x16xf32>
    %112 = arith.mulf %110, %111 : vector<8x16xf32>
    %cst_24 = arith.constant dense<0.000000e+00> : vector<8xf32>
    %113 = vector.multi_reduction <add>, %112, %cst_24 [1] : vector<8x16xf32> to vector<8xf32>
    %114 = vector.shape_cast %113 : vector<8xf32> to vector<8x1xf32>
    %115 = arith.maximumf %93, %114 : vector<8x1xf32>
    %116 = arith.subf %93, %115 : vector<8x1xf32>
    %117 = math.exp %116 : vector<8x1xf32>
    %118 = arith.subf %114, %115 : vector<8x1xf32>
    %119 = math.exp %118 : vector<8x1xf32>
    %120 = arith.mulf %117, %99 : vector<8x1xf32>
    %121 = arith.addf %120, %119 : vector<8x1xf32>
    %122 = vector.broadcast %117 : vector<8x1xf32> to vector<8x16xf32>
    %123 = arith.mulf %122, %104 : vector<8x16xf32>
    %124 = vector.broadcast %119 : vector<8x1xf32> to vector<8x16xf32>
    %125 = arith.mulf %124, %110 : vector<8x16xf32>
    %126 = arith.addf %123, %125 : vector<8x16xf32>
    %127 = vector.extract_strided_slice %9 {offsets = [40, 0], sizes = [8, 16], strides = [1, 1]} : vector<64x16xf32> to vector<8x16xf32>
    %128 = vector.broadcast %11 : vector<1x16xf32> to vector<8x16xf32>
    %129 = arith.addf %127, %128 : vector<8x16xf32>
    %cst_25 = arith.constant dense<0.000000e+00> : vector<8x16xf32>
    %130 = tpu.matmul %110, %10, %cst_25 {dimension_numbers = #tpu.dot_dimension_numbers<[1], [0], [0], [1], [0, 0, 1, 1], [], []>} : vector<8x16xf32>, vector<16x16xf32>, vector<8x16xf32> -> vector<8x16xf32>
    %131 = arith.addf %129, %130 : vector<8x16xf32>
    %132 = math.tanh %131 : vector<8x16xf32>
    %133 = vector.broadcast %12 : vector<1x16xf32> to vector<8x16xf32>
    %134 = arith.mulf %132, %133 : vector<8x16xf32>
    %cst_26 = arith.constant dense<0.000000e+00> : vector<8xf32>
    %135 = vector.multi_reduction <add>, %134, %cst_26 [1] : vector<8x16xf32> to vector<8xf32>
    %136 = vector.shape_cast %135 : vector<8xf32> to vector<8x1xf32>
    %137 = arith.maximumf %115, %136 : vector<8x1xf32>
    %138 = arith.subf %115, %137 : vector<8x1xf32>
    %139 = math.exp %138 : vector<8x1xf32>
    %140 = arith.subf %136, %137 : vector<8x1xf32>
    %141 = math.exp %140 : vector<8x1xf32>
    %142 = arith.mulf %139, %121 : vector<8x1xf32>
    %143 = arith.addf %142, %141 : vector<8x1xf32>
    %144 = vector.broadcast %139 : vector<8x1xf32> to vector<8x16xf32>
    %145 = arith.mulf %144, %126 : vector<8x16xf32>
    %146 = vector.broadcast %141 : vector<8x1xf32> to vector<8x16xf32>
    %147 = arith.mulf %146, %132 : vector<8x16xf32>
    %148 = arith.addf %145, %147 : vector<8x16xf32>
    %149 = vector.extract_strided_slice %9 {offsets = [48, 0], sizes = [8, 16], strides = [1, 1]} : vector<64x16xf32> to vector<8x16xf32>
    %150 = vector.broadcast %11 : vector<1x16xf32> to vector<8x16xf32>
    %151 = arith.addf %149, %150 : vector<8x16xf32>
    %cst_27 = arith.constant dense<0.000000e+00> : vector<8x16xf32>
    %152 = tpu.matmul %132, %10, %cst_27 {dimension_numbers = #tpu.dot_dimension_numbers<[1], [0], [0], [1], [0, 0, 1, 1], [], []>} : vector<8x16xf32>, vector<16x16xf32>, vector<8x16xf32> -> vector<8x16xf32>
    %153 = arith.addf %151, %152 : vector<8x16xf32>
    %154 = math.tanh %153 : vector<8x16xf32>
    %155 = vector.broadcast %12 : vector<1x16xf32> to vector<8x16xf32>
    %156 = arith.mulf %154, %155 : vector<8x16xf32>
    %cst_28 = arith.constant dense<0.000000e+00> : vector<8xf32>
    %157 = vector.multi_reduction <add>, %156, %cst_28 [1] : vector<8x16xf32> to vector<8xf32>
    %158 = vector.shape_cast %157 : vector<8xf32> to vector<8x1xf32>
    %159 = arith.maximumf %137, %158 : vector<8x1xf32>
    %160 = arith.subf %137, %159 : vector<8x1xf32>
    %161 = math.exp %160 : vector<8x1xf32>
    %162 = arith.subf %158, %159 : vector<8x1xf32>
    %163 = math.exp %162 : vector<8x1xf32>
    %164 = arith.mulf %161, %143 : vector<8x1xf32>
    %165 = arith.addf %164, %163 : vector<8x1xf32>
    %166 = vector.broadcast %161 : vector<8x1xf32> to vector<8x16xf32>
    %167 = arith.mulf %166, %148 : vector<8x16xf32>
    %168 = vector.broadcast %163 : vector<8x1xf32> to vector<8x16xf32>
    %169 = arith.mulf %168, %154 : vector<8x16xf32>
    %170 = arith.addf %167, %169 : vector<8x16xf32>
    %171 = vector.extract_strided_slice %9 {offsets = [56, 0], sizes = [8, 16], strides = [1, 1]} : vector<64x16xf32> to vector<8x16xf32>
    %172 = vector.broadcast %11 : vector<1x16xf32> to vector<8x16xf32>
    %173 = arith.addf %171, %172 : vector<8x16xf32>
    %cst_29 = arith.constant dense<0.000000e+00> : vector<8x16xf32>
    %174 = tpu.matmul %154, %10, %cst_29 {dimension_numbers = #tpu.dot_dimension_numbers<[1], [0], [0], [1], [0, 0, 1, 1], [], []>} : vector<8x16xf32>, vector<16x16xf32>, vector<8x16xf32> -> vector<8x16xf32>
    %175 = arith.addf %173, %174 : vector<8x16xf32>
    %176 = math.tanh %175 : vector<8x16xf32>
    %177 = vector.broadcast %12 : vector<1x16xf32> to vector<8x16xf32>
    %178 = arith.mulf %176, %177 : vector<8x16xf32>
    %cst_30 = arith.constant dense<0.000000e+00> : vector<8xf32>
    %179 = vector.multi_reduction <add>, %178, %cst_30 [1] : vector<8x16xf32> to vector<8xf32>
    %180 = vector.shape_cast %179 : vector<8xf32> to vector<8x1xf32>
    %181 = arith.maximumf %159, %180 : vector<8x1xf32>
    %182 = arith.subf %159, %181 : vector<8x1xf32>
    %183 = math.exp %182 : vector<8x1xf32>
    %184 = arith.subf %180, %181 : vector<8x1xf32>
    %185 = math.exp %184 : vector<8x1xf32>
    %186 = arith.mulf %183, %165 : vector<8x1xf32>
    %187 = arith.addf %186, %185 : vector<8x1xf32>
    %188 = vector.broadcast %183 : vector<8x1xf32> to vector<8x16xf32>
    %189 = arith.mulf %188, %170 : vector<8x16xf32>
    %190 = vector.broadcast %185 : vector<8x1xf32> to vector<8x16xf32>
    %191 = arith.mulf %190, %176 : vector<8x16xf32>
    %192 = arith.addf %189, %191 : vector<8x16xf32>
    %193 = tpu.reciprocal %187 : vector<8x1xf32> -> vector<8x1xf32>
    %194 = vector.broadcast %193 : vector<8x1xf32> to vector<8x16xf32>
    %195 = arith.mulf %192, %194 : vector<8x16xf32>
    %c0_31 = arith.constant 0 : index
    %c0_32 = arith.constant 0 : index
    %196 = vector.load %arg6[%c0_31, %c0_32] : memref<16x128xf32, #tpu.memory_space<vmem>>, vector<16x128xf32>
    %cst_33 = arith.constant dense<0.000000e+00> : vector<8x128xf32>
    %197 = tpu.matmul %195, %196, %cst_33 {dimension_numbers = #tpu.dot_dimension_numbers<[1], [0], [0], [1], [0, 0, 1, 1], [], []>} : vector<8x16xf32>, vector<16x128xf32>, vector<8x128xf32> -> vector<8x128xf32>
    %c0_34 = arith.constant 0 : index
    %c0_35 = arith.constant 0 : index
    %198 = vector.load %arg7[%c0_34, %c0_35] : memref<1x128xf32, #tpu.memory_space<vmem>>, vector<1x128xf32>
    %199 = vector.broadcast %198 : vector<1x128xf32> to vector<8x128xf32>
    %200 = arith.addf %197, %199 : vector<8x128xf32>
    %c0_36 = arith.constant 0 : index
    %c0_37 = arith.constant 0 : index
    %201 = vector.load %arg8[%c0_36, %c0_37] : memref<8x128xf32, #tpu.memory_space<vmem>>, vector<8x128xf32>
    tpu.vector_store %arg8[%c0_36, %c0_37], %200 {strides = array<i32>} : memref<8x128xf32, #tpu.memory_space<vmem>>, vector<8x128xf32>,
    return
  }
  func.func @transform_0(%arg0: i32) -> (i32, i32, i32, i32) {
    %c0_i32 = arith.constant 0 : i32
    %c0_i32_0 = arith.constant 0 : i32
    %c0_i32_1 = arith.constant 0 : i32
    %c0_i32_2 = arith.constant 0 : i32
    return %arg0, %c0_i32, %c0_i32_0, %c0_i32_1 : i32, i32, i32, i32
  }
  func.func @transform_1(%arg0: i32) -> (i32, i32) {
    %c0_i32 = arith.constant 0 : i32
    %c0_i32_0 = arith.constant 0 : i32
    %c0_i32_1 = arith.constant 0 : i32
    return %c0_i32, %c0_i32_0 : i32, i32
  }
  func.func @transform_2(%arg0: i32) -> (i32, i32) {
    %c0_i32 = arith.constant 0 : i32
    %c0_i32_0 = arith.constant 0 : i32
    %c0_i32_1 = arith.constant 0 : i32
    return %c0_i32, %c0_i32_0 : i32, i32
  }
  func.func @transform_3(%arg0: i32) -> (i32, i32) {
    %c0_i32 = arith.constant 0 : i32
    %c0_i32_0 = arith.constant 0 : i32
    %c0_i32_1 = arith.constant 0 : i32
    return %c0_i32, %c0_i32_0 : i32, i32
  }
  func.func @transform_4(%arg0: i32) -> (i32, i32) {
    %c0_i32 = arith.constant 0 : i32
    %c0_i32_0 = arith.constant 0 : i32
    %c0_i32_1 = arith.constant 0 : i32
    return %c0_i32, %c0_i32_0 : i32, i32
  }
  func.func @transform_5(%arg0: i32) -> (i32, i32) {
    %c0_i32 = arith.constant 0 : i32
    %c0_i32_0 = arith.constant 0 : i32
    %c0_i32_1 = arith.constant 0 : i32
    return %c0_i32, %c0_i32_0 : i32, i32
  }
  func.func @transform_6(%arg0: i32) -> (i32, i32) {
    %c0_i32 = arith.constant 0 : i32
    %c0_i32_0 = arith.constant 0 : i32
    %c0_i32_1 = arith.constant 0 : i32
    return %c0_i32, %c0_i32_0 : i32, i32
  }
  func.func @transform_7(%arg0: i32) -> (i32, i32) {
    %c0_i32 = arith.constant 0 : i32
    %c0_i32_0 = arith.constant 0 : i32
    return %arg0, %c0_i32 : i32, i32
  }
}

</mosaic_0001>

<llo_original>
// kernel: rnn_with_attention_forward.1
$region0: #{rnn_with_attention_forward.1}
  #allocation0 [shape = 'u32[]', space=smem, size = 0x4, offset = 0x4, fixed_abs, tag = 'smem constant byte address 0x4 - core index']
  #allocation1 [shape = 'u32[144,128]{1,0:T(1,128)}', space=vmem, size = 0x12000, scoped, tag = 'internal scratch']
  %s0 = inlined_call_operand.vmem [shape: s32[2,8,8,1], index: 0, kind: input, shape index: {}]
  %s1 = inlined_call_operand.vmem [shape: f32[19,16], index: 1, kind: input, shape index: {}]
  %s2 = inlined_call_operand.vmem [shape: f32[16,16], index: 2, kind: input, shape index: {}]
  %s3 = inlined_call_operand.vmem [shape: f32[1,16], index: 3, kind: input, shape index: {}]
  %s4 = inlined_call_operand.vmem [shape: f32[1,16], index: 4, kind: input, shape index: {}]
  %s5 = inlined_call_operand.vmem [shape: f32[16,128], index: 5, kind: input, shape index: {}]
  %s6 = inlined_call_operand.vmem [shape: f32[1,128], index: 6, kind: input, shape index: {}]
  %s7 = inlined_call_operand.hbm [shape: f32[16,128], index: 7, kind: output, shape index: {}]
  %s8 = sld [smem:[#allocation0]]
  $region61: #{rnn_with_attention_forward.1} parent=0
    _
  %s10 = ssub.s32 1, %s8
  %s11 = scalar_select 0, %s10, %s8
  $region1: #{rnn_with_attention_forward.1} parent=0
    #allocation2 [shape = 'u8[8192]{0}', space=vmem, size = 0x2000, scoped, tag = 'output window, operand 0']
    #allocation3 [shape = 's32[2]{0}', space=sflag, size = 0x8, scoped, tag = 'scoped memory for rnn_with_attention_forward.1']
    %12 = vsyncpa [#allocation3], 0
    %s13 = scalar_lea.sflag [#allocation3], 1
    %14 = vsyncpa %s13, 0
    loop: start=0, step=1, limit=4
    $region2: #{rnn_with_attention_forward.1} parent=1 // loop_pre_header
      _
    $region3: #{rnn_with_attention_forward.1} parent=1 // loop_header
      %s16 = sphi 0, %s20
      %p17 = scmp.ge.s32.totalorder %s16, 4
      %s26 = sphi 0, %s28
      %s29 = sphi 0, %s26
      %s30 = sphi 0, %s29
      %s46 = sphi 0, %s30
      %s50 = sphi 0, %s50
      %s52 = sphi 0, %s50
      %s53 = sphi 0, %s52
      %s67 = sphi 0, %s53
      %s71 = sphi 0, %s71
      %s73 = sphi 0, %s71
      %s74 = sphi 0, %s73
      %s88 = sphi 0, %s74
      %s92 = sphi 0, %s92
      %s94 = sphi 0, %s92
      %s95 = sphi 0, %s94
      %s109 = sphi 0, %s95
      %s113 = sphi 0, %s113
      %s115 = sphi 0, %s113
      %s116 = sphi 0, %s115
      %s130 = sphi 0, %s116
      %s134 = sphi 0, %s134
      %s136 = sphi 0, %s134
      %s137 = sphi 0, %s136
      %s151 = sphi 0, %s137
      %s155 = sphi 0, %s155
      %s157 = sphi 0, %s155
      %s158 = sphi 0, %s157
      %s172 = sphi 0, %s158
      %s178 = sphi 0, %s180
      %s181 = sphi 0, %s178
      %s182 = sphi 0, %s181
      %s198 = sphi 0, %s182
    $region4: #{rnn_with_attention_forward.1} parent=1 // loop_header_branch
      %19 = sbr.rel (%p17) target = $region8
    $region5: #{rnn_with_attention_forward.1} parent=1 // loop_body
      %s21 = ssub.s32 %s16, 1
      %s22 = ssub.s32 %s16, 2
      %s23 = sadd.s32 %s16, 1
      %s24 = ssub.s32 %s16, %s23
      %p25 = scmp.eq.s32.totalorder %s24, 0
      %s27 = sadd.s32 %s26, 1
      %s28 = scalar_select %p25, %s26, %s27
      %p31 = pneg %p25
      %p32 = scmp.eq.s32.totalorder %s16, 1
      %p33 = por %p31, %p32
      %p34 = scmp.ne.s32.totalorder %s26, %s29
      %p35 = scmp.eq.s32.totalorder %s16, 0
      %p36 = por %p34, %p35
      %p37 = scmp.ne.s32.totalorder %s26, %s29
      %p38 = scmp.eq.s32.totalorder %s21, 1
      %p39 = por %p37, %p38
      %p40 = scmp.ne.s32.totalorder %s29, %s30
      %p41 = scmp.eq.s32.totalorder %s21, 0
      %p42 = por %p40, %p41
      %p43 = scmp.ne.s32.totalorder %s29, %s30
      %p44 = scmp.eq.s32.totalorder %s22, 1
      %p45 = por %p43, %p44
      %p47 = scmp.ne.s32.totalorder %s30, %s46
      %p48 = scmp.eq.s32.totalorder %s22, 0
      %p49 = por %p47, %p48
      %s51 = sadd.s32 %s50, 1
      %p54 = scmp.eq.s32.totalorder %s16, 1
      %p55 = scmp.ne.s32.totalorder %s50, %s52
      %p56 = scmp.eq.s32.totalorder %s16, 0
      %p57 = por %p55, %p56
      %p58 = scmp.ne.s32.totalorder %s50, %s52
      %p59 = scmp.eq.s32.totalorder %s21, 1
      %p60 = por %p58, %p59
      %p61 = scmp.ne.s32.totalorder %s52, %s53
      %p62 = scmp.eq.s32.totalorder %s21, 0
      %p63 = por %p61, %p62
      %p64 = scmp.ne.s32.totalorder %s52, %s53
      %p65 = scmp.eq.s32.totalorder %s22, 1
      %p66 = por %p64, %p65
      %p68 = scmp.ne.s32.totalorder %s53, %s67
      %p69 = scmp.eq.s32.totalorder %s22, 0
      %p70 = por %p68, %p69
      %s72 = sadd.s32 %s71, 1
      %p75 = scmp.eq.s32.totalorder %s16, 1
      %p76 = scmp.ne.s32.totalorder %s71, %s73
      %p77 = scmp.eq.s32.totalorder %s16, 0
      %p78 = por %p76, %p77
      %p79 = scmp.ne.s32.totalorder %s71, %s73
      %p80 = scmp.eq.s32.totalorder %s21, 1
      %p81 = por %p79, %p80
      %p82 = scmp.ne.s32.totalorder %s73, %s74
      %p83 = scmp.eq.s32.totalorder %s21, 0
      %p84 = por %p82, %p83
      %p85 = scmp.ne.s32.totalorder %s73, %s74
      %p86 = scmp.eq.s32.totalorder %s22, 1
      %p87 = por %p85, %p86
      %p89 = scmp.ne.s32.totalorder %s74, %s88
      %p90 = scmp.eq.s32.totalorder %s22, 0
      %p91 = por %p89, %p90
      %s93 = sadd.s32 %s92, 1
      %p96 = scmp.eq.s32.totalorder %s16, 1
      %p97 = scmp.ne.s32.totalorder %s92, %s94
      %p98 = scmp.eq.s32.totalorder %s16, 0
      %p99 = por %p97, %p98
      %p100 = scmp.ne.s32.totalorder %s92, %s94
      %p101 = scmp.eq.s32.totalorder %s21, 1
      %p102 = por %p100, %p101
      %p103 = scmp.ne.s32.totalorder %s94, %s95
      %p104 = scmp.eq.s32.totalorder %s21, 0
      %p105 = por %p103, %p104
      %p106 = scmp.ne.s32.totalorder %s94, %s95
      %p107 = scmp.eq.s32.totalorder %s22, 1
      %p108 = por %p106, %p107
      %p110 = scmp.ne.s32.totalorder %s95, %s109
      %p111 = scmp.eq.s32.totalorder %s22, 0
      %p112 = por %p110, %p111
      %s114 = sadd.s32 %s113, 1
      %p117 = scmp.eq.s32.totalorder %s16, 1
      %p118 = scmp.ne.s32.totalorder %s113, %s115
      %p119 = scmp.eq.s32.totalorder %s16, 0
      %p120 = por %p118, %p119
      %p121 = scmp.ne.s32.totalorder %s113, %s115
      %p122 = scmp.eq.s32.totalorder %s21, 1
      %p123 = por %p121, %p122
      %p124 = scmp.ne.s32.totalorder %s115, %s116
      %p125 = scmp.eq.s32.totalorder %s21, 0
      %p126 = por %p124, %p125
      %p127 = scmp.ne.s32.totalorder %s115, %s116
      %p128 = scmp.eq.s32.totalorder %s22, 1
      %p129 = por %p127, %p128
      %p131 = scmp.ne.s32.totalorder %s116, %s130
      %p132 = scmp.eq.s32.totalorder %s22, 0
      %p133 = por %p131, %p132
      %s135 = sadd.s32 %s134, 1
      %p138 = scmp.eq.s32.totalorder %s16, 1
      %p139 = scmp.ne.s32.totalorder %s134, %s136
      %p140 = scmp.eq.s32.totalorder %s16, 0
      %p141 = por %p139, %p140
      %p142 = scmp.ne.s32.totalorder %s134, %s136
      %p143 = scmp.eq.s32.totalorder %s21, 1
      %p144 = por %p142, %p143
      %p145 = scmp.ne.s32.totalorder %s136, %s137
      %p146 = scmp.eq.s32.totalorder %s21, 0
      %p147 = por %p145, %p146
      %p148 = scmp.ne.s32.totalorder %s136, %s137
      %p149 = scmp.eq.s32.totalorder %s22, 1
      %p150 = por %p148, %p149
      %p152 = scmp.ne.s32.totalorder %s137, %s151
      %p153 = scmp.eq.s32.totalorder %s22, 0
      %p154 = por %p152, %p153
      %s156 = sadd.s32 %s155, 1
      %p159 = scmp.eq.s32.totalorder %s16, 1
      %p160 = scmp.ne.s32.totalorder %s155, %s157
      %p161 = scmp.eq.s32.totalorder %s16, 0
      %p162 = por %p160, %p161
      %p163 = scmp.ne.s32.totalorder %s155, %s157
      %p164 = scmp.eq.s32.totalorder %s21, 1
      %p165 = por %p163, %p164
      %p166 = scmp.ne.s32.totalorder %s157, %s158
      %p167 = scmp.eq.s32.totalorder %s21, 0
      %p168 = por %p166, %p167
      %p169 = scmp.ne.s32.totalorder %s157, %s158
      %p170 = scmp.eq.s32.totalorder %s22, 1
      %p171 = por %p169, %p170
      %p173 = scmp.ne.s32.totalorder %s158, %s172
      %p174 = scmp.eq.s32.totalorder %s22, 0
      %p175 = por %p173, %p174
      %s176 = ssub.s32 %s16, %s23
      %p177 = scmp.eq.s32.totalorder %s176, 0
      %s179 = sadd.s32 %s178, 1
      %s180 = scalar_select %p177, %s178, %s179
      %p183 = pneg %p177
      %p184 = scmp.eq.s32.totalorder %s16, 1
      %p185 = por %p183, %p184
      %p186 = scmp.ne.s32.totalorder %s178, %s181
      %p187 = scmp.eq.s32.totalorder %s16, 0
      %p188 = por %p186, %p187
      %p189 = scmp.ne.s32.totalorder %s178, %s181
      %p190 = scmp.eq.s32.totalorder %s21, 1
      %p191 = por %p189, %p190
      %p192 = scmp.ne.s32.totalorder %s181, %s182
      %p193 = scmp.eq.s32.totalorder %s21, 0
      %p194 = por %p192, %p193
      %p195 = scmp.ne.s32.totalorder %s181, %s182
      %p196 = scmp.eq.s32.totalorder %s22, 1
      %p197 = por %p195, %p196
      %p199 = scmp.ne.s32.totalorder %s182, %s198
      %p200 = scmp.eq.s32.totalorder %s22, 0
      %p201 = por %p199, %p200
      %p202 = scmp.le.s32.totalorder 1, %s16
      %p203 = scmp.lt.s32.totalorder %s16, 3
      %p204 = pnand %p202, %p203
      %p205 = pneg %p204
      // Predicated region
      $region9: #{rnn_with_attention_forward.1} parent=5 // pred_check
        _
      $region10: #{rnn_with_attention_forward.1} parent=5 // pred_check_branch
        %207 = sbr.rel (%p204) target = $region12
      $region11: #{rnn_with_attention_forward.1} parent=5 // pred_region
        %s208 = ssub.s32 %s16, 1
        // Predicated region
        $region13: #{rnn_with_attention_forward.1} parent=11 // pred_check
          %p209 = pneg %p63
        $region14: #{rnn_with_attention_forward.1} parent=11 // pred_check_branch
          %211 = sbr.rel (%p209) target = $region16
        $region15: #{rnn_with_attention_forward.1} parent=11 // pred_region
          _
        $region16: #{rnn_with_attention_forward.1} parent=11 // pred_fallthru
          _
        // Predicated region
        $region17: #{rnn_with_attention_forward.1} parent=11 // pred_check
          %p212 = pneg %p84
        $region18: #{rnn_with_attention_forward.1} parent=11 // pred_check_branch
          %214 = sbr.rel (%p212) target = $region20
        $region19: #{rnn_with_attention_forward.1} parent=11 // pred_region
          _
        $region20: #{rnn_with_attention_forward.1} parent=11 // pred_fallthru
          _
        // Predicated region
        $region21: #{rnn_with_attention_forward.1} parent=11 // pred_check
          %p215 = pneg %p105
        $region22: #{rnn_with_attention_forward.1} parent=11 // pred_check_branch
          %217 = sbr.rel (%p215) target = $region24
        $region23: #{rnn_with_attention_forward.1} parent=11 // pred_region
          _
        $region24: #{rnn_with_attention_forward.1} parent=11 // pred_fallthru
          _
        // Predicated region
        $region25: #{rnn_with_attention_forward.1} parent=11 // pred_check
          %p218 = pneg %p126
        $region26: #{rnn_with_attention_forward.1} parent=11 // pred_check_branch
          %220 = sbr.rel (%p218) target = $region28
        $region27: #{rnn_with_attention_forward.1} parent=11 // pred_region
          _
        $region28: #{rnn_with_attention_forward.1} parent=11 // pred_fallthru
          _
        // Predicated region
        $region29: #{rnn_with_attention_forward.1} parent=11 // pred_check
          %p221 = pneg %p147
        $region30: #{rnn_with_attention_forward.1} parent=11 // pred_check_branch
          %223 = sbr.rel (%p221) target = $region32
        $region31: #{rnn_with_attention_forward.1} parent=11 // pred_region
          _
        $region32: #{rnn_with_attention_forward.1} parent=11 // pred_fallthru
          _
        // Predicated region
        $region33: #{rnn_with_attention_forward.1} parent=11 // pred_check
          %p224 = pneg %p168
        $region34: #{rnn_with_attention_forward.1} parent=11 // pred_check_branch
          %226 = sbr.rel (%p224) target = $region36
        $region35: #{rnn_with_attention_forward.1} parent=11 // pred_region
          _
        $region36: #{rnn_with_attention_forward.1} parent=11 // pred_fallthru
          _
      $region12: #{rnn_with_attention_forward.1} parent=5 // pred_fallthru
        _
      %p227 = scmp.lt.s32.totalorder %s16, 2
      // Predicated region
      $region37: #{rnn_with_attention_forward.1} parent=5 // pred_check
        %p228 = pneg %p227
      $region38: #{rnn_with_attention_forward.1} parent=5 // pred_check_branch
        %230 = sbr.rel (%p228) target = $region40
      $region39: #{rnn_with_attention_forward.1} parent=5 // pred_region
        // Predicated region
        $region41: #{rnn_with_attention_forward.1} parent=39 // pred_check
          %p231 = pneg %p36
        $region42: #{rnn_with_attention_forward.1} parent=39 // pred_check_branch
          %233 = sbr.rel (%p231) target = $region44
        $region43: #{rnn_with_attention_forward.1} parent=39 // pred_region
          %p234 = scmp.lt.s32.totalorder %s16, 1
          %s235 = scalar_select %p234, %s16, 1
          %s236 = smul.addr %s235, 8
          %s237 = smul.addr %s236, 8
          %s238 = scalar_lea.vmem %s0, %s237
        $region44: #{rnn_with_attention_forward.1} parent=39 // pred_fallthru
          _
      $region40: #{rnn_with_attention_forward.1} parent=5 // pred_fallthru
        _
      %p239 = scmp.le.s32.totalorder 1, %s16
      %p240 = scmp.lt.s32.totalorder %s16, 3
      %p241 = pnand %p239, %p240
      %p242 = pneg %p241
      // Predicated region
      $region45: #{rnn_with_attention_forward.1} parent=5 // pred_check
        _
      $region46: #{rnn_with_attention_forward.1} parent=5 // pred_check_branch
        %244 = sbr.rel (%p241) target = $region48
      $region47: #{rnn_with_attention_forward.1} parent=5 // pred_region
        %s245 = ssub.s32 %s16, 1
        %p246 = scmp.lt.s32.totalorder %s21, 1
        %s247 = scalar_select %p246, %s21, 1
        %s248 = smul.addr %s247, 8
        %s249 = smul.addr %s248, 8
        %s250 = scalar_lea.vmem %s0, %s249
        %p251 = pneg %p42
        %p252 = pneg %p39
        %p253 = pneg %p63
        %p254 = pneg %p60
        %p255 = pneg %p84
        %p256 = pneg %p81
        %p257 = pneg %p105
        %p258 = pneg %p102
        %p259 = pneg %p126
        %p260 = pneg %p123
        %p261 = pneg %p147
        %p262 = pneg %p144
        %p263 = pneg %p168
        %p264 = pneg %p165
        %p265 = pneg %p194
        %p266 = pneg %p191
        %s267 = sand.u32 %s181, 1
        %s268 = scalar_lea.sflag [#allocation3], %s267
        %s269 = sand.u32 %s181, 1
        %s270 = smul.addr %s269, 8
        %s271 = scalar_lea.vmem [#allocation2], %s270
        %p272 = scmp.lt.s32.totalorder %s21, 1
        %s273 = scalar_select %p272, %s21, 1
        %s274 = smul.addr %s273, 8
        %s275 = smul.addr %s274, 8
        %s276 = scalar_lea.vmem %s0, %s275
        %v277 = vld [vmem:[%s276] sm:$0xff]
        %v278 = vld [vmem:[%s276 + $0x8] sm:$0xff]
        %v279 = vld [vmem:[%s276 + $0x10] sm:$0xff]
        %v280 = vld [vmem:[%s276 + $0x18] sm:$0xff]
        %v281 = vld [vmem:[%s276 + $0x20] sm:$0xff]
        %v282 = vld [vmem:[%s276 + $0x28] sm:$0xff]
        %v283 = vld [vmem:[%s276 + $0x30] sm:$0xff]
        %v284 = vld [vmem:[%s276 + $0x38] sm:$0xff]
        %v285 = vlaneseq
        %v286 = vand.u32 %v285, 127
        %287 = vset.pattern.permute.xlu0 0
        %288 = vperm.xlu0 %287, %v277
        %v289 = vpop.permute.xlu0 %288
        %290 = vset.pattern.permute.xlu0 0
        %291 = vperm.xlu0 %290, %v278
        %v292 = vpop.permute.xlu0 %291
        %293 = vset.pattern.permute.xlu0 0
        %294 = vperm.xlu0 %293, %v279
        %v295 = vpop.permute.xlu0 %294
        %296 = vset.pattern.permute.xlu0 0
        %297 = vperm.xlu0 %296, %v280
        %v298 = vpop.permute.xlu0 %297
        %299 = vset.pattern.permute.xlu0 0
        %300 = vperm.xlu0 %299, %v281
        %v301 = vpop.permute.xlu0 %300
        %302 = vset.pattern.permute.xlu0 0
        %303 = vperm.xlu0 %302, %v282
        %v304 = vpop.permute.xlu0 %303
        %305 = vset.pattern.permute.xlu0 0
        %306 = vperm.xlu0 %305, %v283
        %v307 = vpop.permute.xlu0 %306
        %308 = vset.pattern.permute.xlu0 0
        %309 = vperm.xlu0 %308, %v284
        %v310 = vpop.permute.xlu0 %309
        %vm311 = vcmp.eq.s32.totalorder %v286, %v289
        %vm312 = vcmp.eq.s32.totalorder %v286, %v292
        %vm313 = vcmp.eq.s32.totalorder %v286, %v295
        %vm314 = vcmp.eq.s32.totalorder %v286, %v298
        %vm315 = vcmp.eq.s32.totalorder %v286, %v301
        %vm316 = vcmp.eq.s32.totalorder %v286, %v304
        %vm317 = vcmp.eq.s32.totalorder %v286, %v307
        %vm318 = vcmp.eq.s32.totalorder %v286, %v310
        %v319 = vsel %vm311, 1, 0
        %v320 = vsel %vm312, 1, 0
        %v321 = vsel %vm313, 1, 0
        %v322 = vsel %vm314, 1, 0
        %v323 = vsel %vm315, 1, 0
        %v324 = vsel %vm316, 1, 0
        %v325 = vsel %vm317, 1, 0
        %v326 = vsel %vm318, 1, 0
        %v327 = vcvt.s32.f32 %v319
        %v328 = vcvt.s32.f32 %v320
        %v329 = vcvt.s32.f32 %v321
        %v330 = vcvt.s32.f32 %v322
        %v331 = vcvt.s32.f32 %v323
        %v332 = vcvt.s32.f32 %v324
        %v333 = vcvt.s32.f32 %v325
        %v334 = vcvt.s32.f32 %v326
        %v335 = vld [vmem:[%s1] sm:$0xff]
        %v336 = vld [vmem:[%s1 + $0x8] sm:$0xff]
        %v337 = vld [vmem:[%s1 + $0x10] sm:$0x7]
        %vm338 = vcmask 154624
        %v340 = vsel %vm338, %v327, 0
        %v343 = vsel %vm338, %v328, 0
        %v346 = vsel %vm338, %v329, 0
        %v349 = vsel %vm338, %v330, 0
        %v352 = vsel %vm338, %v331, 0
        %v355 = vsel %vm338, %v332, 0
        %v358 = vsel %vm338, %v333, 0
        %v361 = vsel %vm338, %v334, 0
        %vm363 = vcmask 1042432
        %v365 = vsel %vm363, %v337, 0
        %367 = vmatprep.subr.mxu0 0.0
        %368 = vmatpush1.msra.mxu0 0.0
        %369 = vmatprep.subr.mxu0 0.0
        %370 = vmatpush1.msra.mxu0 0.0
        %371 = vmatprep.subr.mxu0 0.0
        %372 = vmatpush1.msra.mxu0 0.0
        %373 = vmatprep.subr.mxu0 0.0
        %374 = vmatpush1.msra.mxu0 0.0
        %375 = vmatprep.subr.mxu0 0.0
        %376 = vmatpush1.msra.mxu0 0.0
        %377 = vmatprep.subr.mxu0 0.0
        %378 = vmatpush1.msra.mxu0 0.0
        %379 = vmatprep.subr.mxu0 0.0
        %380 = vmatpush1.msra.mxu0 0.0
        %381 = vmatprep.subr.mxu0 0.0
        %382 = vmatpush1.msra.mxu0 0.0
        %383 = vmatprep.subr.mxu0 0.0
        %384 = vmatpush1.msra.mxu0 0.0
        %385 = vmatprep.subr.mxu0 0.0
        %386 = vmatpush1.msra.mxu0 0.0
        %387 = vmatprep.subr.mxu0 0.0
        %388 = vmatpush1.msra.mxu0 0.0
        %389 = vmatprep.subr.mxu0 0.0
        %390 = vmatpush1.msra.mxu0 0.0
        %391 = vmatprep.subr.mxu0 0.0
        %392 = vmatpush1.msra.mxu0 0.0
        %393 = vmatprep.subr.mxu0 0.0
        %394 = vmatpush1.msra.mxu0 %v365
        %395 = vmatprep.subr.mxu0 0.0
        %396 = vmatpush1.msra.mxu0 %v336
        %397 = vmatprep.subr.mxu0 0.0
        %398 = vmatpush1.msra.mxu0 %v335
        %399 = vmatprep.subr.mxu0 0.0
        %400 = vmatpush2.msra.mxu0 0.0
        %401 = vmatprep.subr.mxu0 0.0
        %402 = vmatpush2.msra.mxu0 0.0
        %403 = vmatprep.subr.mxu0 0.0
        %404 = vmatpush2.msra.mxu0 0.0
        %405 = vmatprep.subr.mxu0 0.0
        %406 = vmatpush2.msra.mxu0 0.0
        %407 = vmatprep.subr.mxu0 0.0
        %408 = vmatpush2.msra.mxu0 0.0
        %409 = vmatprep.subr.mxu0 0.0
        %410 = vmatpush2.msra.mxu0 0.0
        %411 = vmatprep.subr.mxu0 0.0
        %412 = vmatpush2.msra.mxu0 0.0
        %413 = vmatprep.subr.mxu0 0.0
        %414 = vmatpush2.msra.mxu0 0.0
        %415 = vmatprep.subr.mxu0 0.0
        %416 = vmatpush2.msra.mxu0 0.0
        %417 = vmatprep.subr.mxu0 0.0
        %418 = vmatpush2.msra.mxu0 0.0
        %419 = vmatprep.subr.mxu0 0.0
        %420 = vmatpush2.msra.mxu0 0.0
        %421 = vmatprep.subr.mxu0 0.0
        %422 = vmatpush2.msra.mxu0 0.0
        %423 = vmatprep.subr.mxu0 0.0
        %424 = vmatpush2.msra.mxu0 0.0
        %425 = vmatprep.subr.mxu0 0.0
        %426 = vmatpush2.msra.mxu0 0.0
        %427 = vmatprep.subr.mxu0 0.0
        %428 = vmatpush2.msra.mxu0 0.0
        %429 = vmatprep.subr.mxu0 0.0
        %430 = vmatpush2.msra.mxu0 0.0
        %431 = vmatprep.mubr.f32.mxu0 0.0
        %432 = vmatmul.mubr.f32.gmra.mxu0 %v340
        %v433 = vpop.f32.mrf.mxu0
        %v434 = vadd.f32 0.0, %v433
        %v435 = vpop.f32.mrf.mxu0
        %436 = vmatprep.mubr.f32.mxu0 0.0
        %437 = vmatmul.mubr.f32.gmra.mxu0 %v343
        %v438 = vpop.f32.mrf.mxu0
        %v439 = vadd.f32 0.0, %v438
        %v440 = vpop.f32.mrf.mxu0
        %441 = vmatprep.mubr.f32.mxu0 0.0
        %442 = vmatmul.mubr.f32.gmra.mxu0 %v346
        %v443 = vpop.f32.mrf.mxu0
        %v444 = vadd.f32 0.0, %v443
        %v445 = vpop.f32.mrf.mxu0
        %446 = vmatprep.mubr.f32.mxu0 0.0
        %447 = vmatmul.mubr.f32.gmra.mxu0 %v349
        %v448 = vpop.f32.mrf.mxu0
        %v449 = vadd.f32 0.0, %v448
        %v450 = vpop.f32.mrf.mxu0
        %451 = vmatprep.mubr.f32.mxu0 0.0
        %452 = vmatmul.mubr.f32.gmra.mxu0 %v352
        %v453 = vpop.f32.mrf.mxu0
        %v454 = vadd.f32 0.0, %v453
        %v455 = vpop.f32.mrf.mxu0
        %456 = vmatprep.mubr.f32.mxu0 0.0
        %457 = vmatmul.mubr.f32.gmra.mxu0 %v355
        %v458 = vpop.f32.mrf.mxu0
        %v459 = vadd.f32 0.0, %v458
        %v460 = vpop.f32.mrf.mxu0
        %461 = vmatprep.mubr.f32.mxu0 0.0
        %462 = vmatmul.mubr.f32.gmra.mxu0 %v358
        %v463 = vpop.f32.mrf.mxu0
        %v464 = vadd.f32 0.0, %v463
        %v465 = vpop.f32.mrf.mxu0
        %466 = vmatprep.mubr.f32.mxu0 0.0
        %467 = vmatmul.mubr.f32.gmra.mxu0 %v361
        %v468 = vpop.f32.mrf.mxu0
        %v469 = vadd.f32 0.0, %v468
        %v470 = vpop.f32.mrf.mxu0
        %471 = vdwg.mxu0
        %v472 = vld [vmem:[%s2] sm:$0xff]
        %v473 = vld [vmem:[%s2 + $0x8] sm:$0xff]
        %v474 = vld [vmem:[%s3] sm:$0x1]
        %v475 = vld [vmem:[%s4] sm:$0x1]
        %v477 = vlaneseq
        %v478 = vshrl.u32 %v477, 7
        %v479 = vsub.s32 0, %v478
        %v480 = vrot.slane %v474, %v479
        %v482 = vadd.f32 %v434, %v480
        %vm483 = vcmask 130048
        %v485 = vsel %vm483, 0.0, 0
        %487 = vmatprep.subr.mxu0 0.0
        %488 = vmatpush1.msra.mxu0 0.0
        %489 = vmatprep.subr.mxu0 0.0
        %490 = vmatpush1.msra.mxu0 0.0
        %491 = vmatprep.subr.mxu0 0.0
        %492 = vmatpush1.msra.mxu0 0.0
        %493 = vmatprep.subr.mxu0 0.0
        %494 = vmatpush1.msra.mxu0 0.0
        %495 = vmatprep.subr.mxu0 0.0
        %496 = vmatpush1.msra.mxu0 0.0
        %497 = vmatprep.subr.mxu0 0.0
        %498 = vmatpush1.msra.mxu0 0.0
        %499 = vmatprep.subr.mxu0 0.0
        %500 = vmatpush1.msra.mxu0 0.0
        %501 = vmatprep.subr.mxu0 0.0
        %502 = vmatpush1.msra.mxu0 0.0
        %503 = vmatprep.subr.mxu0 0.0
        %504 = vmatpush1.msra.mxu0 0.0
        %505 = vmatprep.subr.mxu0 0.0
        %506 = vmatpush1.msra.mxu0 0.0
        %507 = vmatprep.subr.mxu0 0.0
        %508 = vmatpush1.msra.mxu0 0.0
        %509 = vmatprep.subr.mxu0 0.0
        %510 = vmatpush1.msra.mxu0 0.0
        %511 = vmatprep.subr.mxu0 0.0
        %512 = vmatpush1.msra.mxu0 0.0
        %513 = vmatprep.subr.mxu0 0.0
        %514 = vmatpush1.msra.mxu0 0.0
        %515 = vmatprep.subr.mxu0 0.0
        %516 = vmatpush1.msra.mxu0 %v473
        %517 = vmatprep.subr.mxu0 0.0
        %518 = vmatpush1.msra.mxu0 %v472
        %519 = vmatprep.subr.mxu0 0.0
        %520 = vmatpush2.msra.mxu0 0.0
        %521 = vmatprep.subr.mxu0 0.0
        %522 = vmatpush2.msra.mxu0 0.0
        %523 = vmatprep.subr.mxu0 0.0
        %524 = vmatpush2.msra.mxu0 0.0
        %525 = vmatprep.subr.mxu0 0.0
        %526 = vmatpush2.msra.mxu0 0.0
        %527 = vmatprep.subr.mxu0 0.0
        %528 = vmatpush2.msra.mxu0 0.0
        %529 = vmatprep.subr.mxu0 0.0
        %530 = vmatpush2.msra.mxu0 0.0
        %531 = vmatprep.subr.mxu0 0.0
        %532 = vmatpush2.msra.mxu0 0.0
        %533 = vmatprep.subr.mxu0 0.0
        %534 = vmatpush2.msra.mxu0 0.0
        %535 = vmatprep.subr.mxu0 0.0
        %536 = vmatpush2.msra.mxu0 0.0
        %537 = vmatprep.subr.mxu0 0.0
        %538 = vmatpush2.msra.mxu0 0.0
        %539 = vmatprep.subr.mxu0 0.0
        %540 = vmatpush2.msra.mxu0 0.0
        %541 = vmatprep.subr.mxu0 0.0
        %542 = vmatpush2.msra.mxu0 0.0
        %543 = vmatprep.subr.mxu0 0.0
        %544 = vmatpush2.msra.mxu0 0.0
        %545 = vmatprep.subr.mxu0 0.0
        %546 = vmatpush2.msra.mxu0 0.0
        %547 = vmatprep.subr.mxu0 0.0
        %548 = vmatpush2.msra.mxu0 0.0
        %549 = vmatprep.subr.mxu0 0.0
        %550 = vmatpush2.msra.mxu0 0.0
        %551 = vmatprep.mubr.f32.mxu0 0.0
        %552 = vmatmul.mubr.f32.gmra.mxu0 %v485
        %v553 = vpop.f32.mrf.mxu0
        %v554 = vadd.f32 0.0, %v553
        %v555 = vpop.f32.mrf.mxu0
        %556 = vdwg.mxu0
        %v557 = vadd.f32 %v482, %v554
        %v558 = vtanh.pop %v557
        %v560 = vlaneseq
        %v561 = vshrl.u32 %v560, 7
        %v562 = vsub.s32 0, %v561
        %v563 = vrot.slane %v475, %v562
        %v565 = vmul.f32 %v558, %v563
        %v566 = vsel %vm483, %v565, 0.0
        %567 = vadd.xlane.f32.xlu0 %v566
        %v568 = vpop.xlane.xlu0 %567
        %v569 = vmax.f32 %v568, -1e+30
        %v570 = vsub.f32 -1e+30, %v569
        %v571 = vmul.f32 %v570, 1.442695
        %v572 = vpow.pop %v571
        %v573 = vsub.f32 %v568, %v569
        %v574 = vmul.f32 %v573, 1.442695
        %v575 = vpow.pop %v574
        %v576 = vmul.f32 %v572, 0.0
        %v577 = vadd.f32 %v576, %v575
        %v578 = vmul.f32 %v575, %v558
        %v579 = vadd.f32 %v576, %v578
        %v580 = vadd.f32 %v439, %v480
        %v582 = vsel %vm483, %v558, 0
        %584 = vmatprep.subr.mxu0 0.0
        %585 = vmatpush1.msra.mxu0 0.0
        %586 = vmatprep.subr.mxu0 0.0
        %587 = vmatpush1.msra.mxu0 0.0
        %588 = vmatprep.subr.mxu0 0.0
        %589 = vmatpush1.msra.mxu0 0.0
        %590 = vmatprep.subr.mxu0 0.0
        %591 = vmatpush1.msra.mxu0 0.0
        %592 = vmatprep.subr.mxu0 0.0
        %593 = vmatpush1.msra.mxu0 0.0
        %594 = vmatprep.subr.mxu0 0.0
        %595 = vmatpush1.msra.mxu0 0.0
        %596 = vmatprep.subr.mxu0 0.0
        %597 = vmatpush1.msra.mxu0 0.0
        %598 = vmatprep.subr.mxu0 0.0
        %599 = vmatpush1.msra.mxu0 0.0
        %600 = vmatprep.subr.mxu0 0.0
        %601 = vmatpush1.msra.mxu0 0.0
        %602 = vmatprep.subr.mxu0 0.0
        %603 = vmatpush1.msra.mxu0 0.0
        %604 = vmatprep.subr.mxu0 0.0
        %605 = vmatpush1.msra.mxu0 0.0
        %606 = vmatprep.subr.mxu0 0.0
        %607 = vmatpush1.msra.mxu0 0.0
        %608 = vmatprep.subr.mxu0 0.0
        %609 = vmatpush1.msra.mxu0 0.0
        %610 = vmatprep.subr.mxu0 0.0
        %611 = vmatpush1.msra.mxu0 0.0
        %612 = vmatprep.subr.mxu0 0.0
        %613 = vmatpush1.msra.mxu0 %v473
        %614 = vmatprep.subr.mxu0 0.0
        %615 = vmatpush1.msra.mxu0 %v472
        %616 = vmatprep.subr.mxu0 0.0
        %617 = vmatpush2.msra.mxu0 0.0
        %618 = vmatprep.subr.mxu0 0.0
        %619 = vmatpush2.msra.mxu0 0.0
        %620 = vmatprep.subr.mxu0 0.0
        %621 = vmatpush2.msra.mxu0 0.0
        %622 = vmatprep.subr.mxu0 0.0
        %623 = vmatpush2.msra.mxu0 0.0
        %624 = vmatprep.subr.mxu0 0.0
        %625 = vmatpush2.msra.mxu0 0.0
        %626 = vmatprep.subr.mxu0 0.0
        %627 = vmatpush2.msra.mxu0 0.0
        %628 = vmatprep.subr.mxu0 0.0
        %629 = vmatpush2.msra.mxu0 0.0
        %630 = vmatprep.subr.mxu0 0.0
        %631 = vmatpush2.msra.mxu0 0.0
        %632 = vmatprep.subr.mxu0 0.0
        %633 = vmatpush2.msra.mxu0 0.0
        %634 = vmatprep.subr.mxu0 0.0
        %635 = vmatpush2.msra.mxu0 0.0
        %636 = vmatprep.subr.mxu0 0.0
        %637 = vmatpush2.msra.mxu0 0.0
        %638 = vmatprep.subr.mxu0 0.0
        %639 = vmatpush2.msra.mxu0 0.0
        %640 = vmatprep.subr.mxu0 0.0
        %641 = vmatpush2.msra.mxu0 0.0
        %642 = vmatprep.subr.mxu0 0.0
        %643 = vmatpush2.msra.mxu0 0.0
        %644 = vmatprep.subr.mxu0 0.0
        %645 = vmatpush2.msra.mxu0 0.0
        %646 = vmatprep.subr.mxu0 0.0
        %647 = vmatpush2.msra.mxu0 0.0
        %648 = vmatprep.mubr.f32.mxu0 0.0
        %649 = vmatmul.mubr.f32.gmra.mxu0 %v582
        %v650 = vpop.f32.mrf.mxu0
        %v651 = vadd.f32 0.0, %v650
        %v652 = vpop.f32.mrf.mxu0
        %653 = vdwg.mxu0
        %v654 = vadd.f32 %v580, %v651
        %v655 = vtanh.pop %v654
        %v656 = vmul.f32 %v655, %v563
        %v657 = vsel %vm483, %v656, 0.0
        %658 = vadd.xlane.f32.xlu0 %v657
        %v659 = vpop.xlane.xlu0 %658
        %v660 = vmax.f32 %v569, %v659
        %v661 = vsub.f32 %v569, %v660
        %v662 = vmul.f32 %v661, 1.442695
        %v663 = vpow.pop %v662
        %v664 = vsub.f32 %v659, %v660
        %v665 = vmul.f32 %v664, 1.442695
        %v666 = vpow.pop %v665
        %v667 = vmul.f32 %v663, %v577
        %v668 = vadd.f32 %v667, %v666
        %v669 = vmul.f32 %v663, %v579
        %v670 = vmul.f32 %v666, %v655
        %v671 = vadd.f32 %v669, %v670
        %v672 = vadd.f32 %v444, %v480
        %v674 = vsel %vm483, %v655, 0
        %676 = vmatprep.subr.mxu0 0.0
        %677 = vmatpush1.msra.mxu0 0.0
        %678 = vmatprep.subr.mxu0 0.0
        %679 = vmatpush1.msra.mxu0 0.0
        %680 = vmatprep.subr.mxu0 0.0
        %681 = vmatpush1.msra.mxu0 0.0
        %682 = vmatprep.subr.mxu0 0.0
        %683 = vmatpush1.msra.mxu0 0.0
        %684 = vmatprep.subr.mxu0 0.0
        %685 = vmatpush1.msra.mxu0 0.0
        %686 = vmatprep.subr.mxu0 0.0
        %687 = vmatpush1.msra.mxu0 0.0
        %688 = vmatprep.subr.mxu0 0.0
        %689 = vmatpush1.msra.mxu0 0.0
        %690 = vmatprep.subr.mxu0 0.0
        %691 = vmatpush1.msra.mxu0 0.0
        %692 = vmatprep.subr.mxu0 0.0
        %693 = vmatpush1.msra.mxu0 0.0
        %694 = vmatprep.subr.mxu0 0.0
        %695 = vmatpush1.msra.mxu0 0.0
        %696 = vmatprep.subr.mxu0 0.0
        %697 = vmatpush1.msra.mxu0 0.0
        %698 = vmatprep.subr.mxu0 0.0
        %699 = vmatpush1.msra.mxu0 0.0
        %700 = vmatprep.subr.mxu0 0.0
        %701 = vmatpush1.msra.mxu0 0.0
        %702 = vmatprep.subr.mxu0 0.0
        %703 = vmatpush1.msra.mxu0 0.0
        %704 = vmatprep.subr.mxu0 0.0
        %705 = vmatpush1.msra.mxu0 %v473
        %706 = vmatprep.subr.mxu0 0.0
        %707 = vmatpush1.msra.mxu0 %v472
        %708 = vmatprep.subr.mxu0 0.0
        %709 = vmatpush2.msra.mxu0 0.0
        %710 = vmatprep.subr.mxu0 0.0
        %711 = vmatpush2.msra.mxu0 0.0
        %712 = vmatprep.subr.mxu0 0.0
        %713 = vmatpush2.msra.mxu0 0.0
        %714 = vmatprep.subr.mxu0 0.0
        %715 = vmatpush2.msra.mxu0 0.0
        %716 = vmatprep.subr.mxu0 0.0
        %717 = vmatpush2.msra.mxu0 0.0
        %718 = vmatprep.subr.mxu0 0.0
        %719 = vmatpush2.msra.mxu0 0.0
        %720 = vmatprep.subr.mxu0 0.0
        %721 = vmatpush2.msra.mxu0 0.0
        %722 = vmatprep.subr.mxu0 0.0
        %723 = vmatpush2.msra.mxu0 0.0
        %724 = vmatprep.subr.mxu0 0.0
        %725 = vmatpush2.msra.mxu0 0.0
        %726 = vmatprep.subr.mxu0 0.0
        %727 = vmatpush2.msra.mxu0 0.0
        %728 = vmatprep.subr.mxu0 0.0
        %729 = vmatpush2.msra.mxu0 0.0
        %730 = vmatprep.subr.mxu0 0.0
        %731 = vmatpush2.msra.mxu0 0.0
        %732 = vmatprep.subr.mxu0 0.0
        %733 = vmatpush2.msra.mxu0 0.0
        %734 = vmatprep.subr.mxu0 0.0
        %735 = vmatpush2.msra.mxu0 0.0
        %736 = vmatprep.subr.mxu0 0.0
        %737 = vmatpush2.msra.mxu0 0.0
        %738 = vmatprep.subr.mxu0 0.0
        %739 = vmatpush2.msra.mxu0 0.0
        %740 = vmatprep.mubr.f32.mxu0 0.0
        %741 = vmatmul.mubr.f32.gmra.mxu0 %v674
        %v742 = vpop.f32.mrf.mxu0
        %v743 = vadd.f32 0.0, %v742
        %v744 = vpop.f32.mrf.mxu0
        %745 = vdwg.mxu0
        %v746 = vadd.f32 %v672, %v743
        %v747 = vtanh.pop %v746
        %v748 = vmul.f32 %v747, %v563
        %v749 = vsel %vm483, %v748, 0.0
        %750 = vadd.xlane.f32.xlu0 %v749
        %v751 = vpop.xlane.xlu0 %750
        %v752 = vmax.f32 %v660, %v751
        %v753 = vsub.f32 %v660, %v752
        %v754 = vmul.f32 %v753, 1.442695
        %v755 = vpow.pop %v754
        %v756 = vsub.f32 %v751, %v752
        %v757 = vmul.f32 %v756, 1.442695
        %v758 = vpow.pop %v757
        %v759 = vmul.f32 %v755, %v668
        %v760 = vadd.f32 %v759, %v758
        %v761 = vmul.f32 %v755, %v671
        %v762 = vmul.f32 %v758, %v747
        %v763 = vadd.f32 %v761, %v762
        %v764 = vadd.f32 %v449, %v480
        %v766 = vsel %vm483, %v747, 0
        %768 = vmatprep.subr.mxu0 0.0
        %769 = vmatpush1.msra.mxu0 0.0
        %770 = vmatprep.subr.mxu0 0.0
        %771 = vmatpush1.msra.mxu0 0.0
        %772 = vmatprep.subr.mxu0 0.0
        %773 = vmatpush1.msra.mxu0 0.0
        %774 = vmatprep.subr.mxu0 0.0
        %775 = vmatpush1.msra.mxu0 0.0
        %776 = vmatprep.subr.mxu0 0.0
        %777 = vmatpush1.msra.mxu0 0.0
        %778 = vmatprep.subr.mxu0 0.0
        %779 = vmatpush1.msra.mxu0 0.0
        %780 = vmatprep.subr.mxu0 0.0
        %781 = vmatpush1.msra.mxu0 0.0
        %782 = vmatprep.subr.mxu0 0.0
        %783 = vmatpush1.msra.mxu0 0.0
        %784 = vmatprep.subr.mxu0 0.0
        %785 = vmatpush1.msra.mxu0 0.0
        %786 = vmatprep.subr.mxu0 0.0
        %787 = vmatpush1.msra.mxu0 0.0
        %788 = vmatprep.subr.mxu0 0.0
        %789 = vmatpush1.msra.mxu0 0.0
        %790 = vmatprep.subr.mxu0 0.0
        %791 = vmatpush1.msra.mxu0 0.0
        %792 = vmatprep.subr.mxu0 0.0
        %793 = vmatpush1.msra.mxu0 0.0
        %794 = vmatprep.subr.mxu0 0.0
        %795 = vmatpush1.msra.mxu0 0.0
        %796 = vmatprep.subr.mxu0 0.0
        %797 = vmatpush1.msra.mxu0 %v473
        %798 = vmatprep.subr.mxu0 0.0
        %799 = vmatpush1.msra.mxu0 %v472
        %800 = vmatprep.subr.mxu0 0.0
        %801 = vmatpush2.msra.mxu0 0.0
        %802 = vmatprep.subr.mxu0 0.0
        %803 = vmatpush2.msra.mxu0 0.0
        %804 = vmatprep.subr.mxu0 0.0
        %805 = vmatpush2.msra.mxu0 0.0
        %806 = vmatprep.subr.mxu0 0.0
        %807 = vmatpush2.msra.mxu0 0.0
        %808 = vmatprep.subr.mxu0 0.0
        %809 = vmatpush2.msra.mxu0 0.0
        %810 = vmatprep.subr.mxu0 0.0
        %811 = vmatpush2.msra.mxu0 0.0
        %812 = vmatprep.subr.mxu0 0.0
        %813 = vmatpush2.msra.mxu0 0.0
        %814 = vmatprep.subr.mxu0 0.0
        %815 = vmatpush2.msra.mxu0 0.0
        %816 = vmatprep.subr.mxu0 0.0
        %817 = vmatpush2.msra.mxu0 0.0
        %818 = vmatprep.subr.mxu0 0.0
        %819 = vmatpush2.msra.mxu0 0.0
        %820 = vmatprep.subr.mxu0 0.0
        %821 = vmatpush2.msra.mxu0 0.0
        %822 = vmatprep.subr.mxu0 0.0
        %823 = vmatpush2.msra.mxu0 0.0
        %824 = vmatprep.subr.mxu0 0.0
        %825 = vmatpush2.msra.mxu0 0.0
        %826 = vmatprep.subr.mxu0 0.0
        %827 = vmatpush2.msra.mxu0 0.0
        %828 = vmatprep.subr.mxu0 0.0
        %829 = vmatpush2.msra.mxu0 0.0
        %830 = vmatprep.subr.mxu0 0.0
        %831 = vmatpush2.msra.mxu0 0.0
        %832 = vmatprep.mubr.f32.mxu0 0.0
        %833 = vmatmul.mubr.f32.gmra.mxu0 %v766
        %v834 = vpop.f32.mrf.mxu0
        %v835 = vadd.f32 0.0, %v834
        %v836 = vpop.f32.mrf.mxu0
        %837 = vdwg.mxu0
        %v838 = vadd.f32 %v764, %v835
        %v839 = vtanh.pop %v838
        %v840 = vmul.f32 %v839, %v563
        %v841 = vsel %vm483, %v840, 0.0
        %842 = vadd.xlane.f32.xlu0 %v841
        %v843 = vpop.xlane.xlu0 %842
        %v844 = vmax.f32 %v752, %v843
        %v845 = vsub.f32 %v752, %v844
        %v846 = vmul.f32 %v845, 1.442695
        %v847 = vpow.pop %v846
        %v848 = vsub.f32 %v843, %v844
        %v849 = vmul.f32 %v848, 1.442695
        %v850 = vpow.pop %v849
        %v851 = vmul.f32 %v847, %v760
        %v852 = vadd.f32 %v851, %v850
        %v853 = vmul.f32 %v847, %v763
        %v854 = vmul.f32 %v850, %v839
        %v855 = vadd.f32 %v853, %v854
        %v856 = vadd.f32 %v454, %v480
        %v858 = vsel %vm483, %v839, 0
        %860 = vmatprep.subr.mxu0 0.0
        %861 = vmatpush1.msra.mxu0 0.0
        %862 = vmatprep.subr.mxu0 0.0
        %863 = vmatpush1.msra.mxu0 0.0
        %864 = vmatprep.subr.mxu0 0.0
        %865 = vmatpush1.msra.mxu0 0.0
        %866 = vmatprep.subr.mxu0 0.0
        %867 = vmatpush1.msra.mxu0 0.0
        %868 = vmatprep.subr.mxu0 0.0
        %869 = vmatpush1.msra.mxu0 0.0
        %870 = vmatprep.subr.mxu0 0.0
        %871 = vmatpush1.msra.mxu0 0.0
        %872 = vmatprep.subr.mxu0 0.0
        %873 = vmatpush1.msra.mxu0 0.0
        %874 = vmatprep.subr.mxu0 0.0
        %875 = vmatpush1.msra.mxu0 0.0
        %876 = vmatprep.subr.mxu0 0.0
        %877 = vmatpush1.msra.mxu0 0.0
        %878 = vmatprep.subr.mxu0 0.0
        %879 = vmatpush1.msra.mxu0 0.0
        %880 = vmatprep.subr.mxu0 0.0
        %881 = vmatpush1.msra.mxu0 0.0
        %882 = vmatprep.subr.mxu0 0.0
        %883 = vmatpush1.msra.mxu0 0.0
        %884 = vmatprep.subr.mxu0 0.0
        %885 = vmatpush1.msra.mxu0 0.0
        %886 = vmatprep.subr.mxu0 0.0
        %887 = vmatpush1.msra.mxu0 0.0
        %888 = vmatprep.subr.mxu0 0.0
        %889 = vmatpush1.msra.mxu0 %v473
        %890 = vmatprep.subr.mxu0 0.0
        %891 = vmatpush1.msra.mxu0 %v472
        %892 = vmatprep.subr.mxu0 0.0
        %893 = vmatpush2.msra.mxu0 0.0
        %894 = vmatprep.subr.mxu0 0.0
        %895 = vmatpush2.msra.mxu0 0.0
        %896 = vmatprep.subr.mxu0 0.0
        %897 = vmatpush2.msra.mxu0 0.0
        %898 = vmatprep.subr.mxu0 0.0
        %899 = vmatpush2.msra.mxu0 0.0
        %900 = vmatprep.subr.mxu0 0.0
        %901 = vmatpush2.msra.mxu0 0.0
        %902 = vmatprep.subr.mxu0 0.0
        %903 = vmatpush2.msra.mxu0 0.0
        %904 = vmatprep.subr.mxu0 0.0
        %905 = vmatpush2.msra.mxu0 0.0
        %906 = vmatprep.subr.mxu0 0.0
        %907 = vmatpush2.msra.mxu0 0.0
        %908 = vmatprep.subr.mxu0 0.0
        %909 = vmatpush2.msra.mxu0 0.0
        %910 = vmatprep.subr.mxu0 0.0
        %911 = vmatpush2.msra.mxu0 0.0
        %912 = vmatprep.subr.mxu0 0.0
        %913 = vmatpush2.msra.mxu0 0.0
        %914 = vmatprep.subr.mxu0 0.0
        %915 = vmatpush2.msra.mxu0 0.0
        %916 = vmatprep.subr.mxu0 0.0
        %917 = vmatpush2.msra.mxu0 0.0
        %918 = vmatprep.subr.mxu0 0.0
        %919 = vmatpush2.msra.mxu0 0.0
        %920 = vmatprep.subr.mxu0 0.0
        %921 = vmatpush2.msra.mxu0 0.0
        %922 = vmatprep.subr.mxu0 0.0
        %923 = vmatpush2.msra.mxu0 0.0
        %924 = vmatprep.mubr.f32.mxu0 0.0
        %925 = vmatmul.mubr.f32.gmra.mxu0 %v858
        %v926 = vpop.f32.mrf.mxu0
        %v927 = vadd.f32 0.0, %v926
        %v928 = vpop.f32.mrf.mxu0
        %929 = vdwg.mxu0
        %v930 = vadd.f32 %v856, %v927
        %v931 = vtanh.pop %v930
        %v932 = vmul.f32 %v931, %v563
        %v933 = vsel %vm483, %v932, 0.0
        %934 = vadd.xlane.f32.xlu0 %v933
        %v935 = vpop.xlane.xlu0 %934
        %v936 = vmax.f32 %v844, %v935
        %v937 = vsub.f32 %v844, %v936
        %v938 = vmul.f32 %v937, 1.442695
        %v939 = vpow.pop %v938
        %v940 = vsub.f32 %v935, %v936
        %v941 = vmul.f32 %v940, 1.442695
        %v942 = vpow.pop %v941
        %v943 = vmul.f32 %v939, %v852
        %v944 = vadd.f32 %v943, %v942
        %v945 = vmul.f32 %v939, %v855
        %v946 = vmul.f32 %v942, %v931
        %v947 = vadd.f32 %v945, %v946
        %v948 = vadd.f32 %v459, %v480
        %v950 = vsel %vm483, %v931, 0
        %952 = vmatprep.subr.mxu0 0.0
        %953 = vmatpush1.msra.mxu0 0.0
        %954 = vmatprep.subr.mxu0 0.0
        %955 = vmatpush1.msra.mxu0 0.0
        %956 = vmatprep.subr.mxu0 0.0
        %957 = vmatpush1.msra.mxu0 0.0
        %958 = vmatprep.subr.mxu0 0.0
        %959 = vmatpush1.msra.mxu0 0.0
        %960 = vmatprep.subr.mxu0 0.0
        %961 = vmatpush1.msra.mxu0 0.0
        %962 = vmatprep.subr.mxu0 0.0
        %963 = vmatpush1.msra.mxu0 0.0
        %964 = vmatprep.subr.mxu0 0.0
        %965 = vmatpush1.msra.mxu0 0.0
        %966 = vmatprep.subr.mxu0 0.0
        %967 = vmatpush1.msra.mxu0 0.0
        %968 = vmatprep.subr.mxu0 0.0
        %969 = vmatpush1.msra.mxu0 0.0
        %970 = vmatprep.subr.mxu0 0.0
        %971 = vmatpush1.msra.mxu0 0.0
        %972 = vmatprep.subr.mxu0 0.0
        %973 = vmatpush1.msra.mxu0 0.0
        %974 = vmatprep.subr.mxu0 0.0
        %975 = vmatpush1.msra.mxu0 0.0
        %976 = vmatprep.subr.mxu0 0.0
        %977 = vmatpush1.msra.mxu0 0.0
        %978 = vmatprep.subr.mxu0 0.0
        %979 = vmatpush1.msra.mxu0 0.0
        %980 = vmatprep.subr.mxu0 0.0
        %981 = vmatpush1.msra.mxu0 %v473
        %982 = vmatprep.subr.mxu0 0.0
        %983 = vmatpush1.msra.mxu0 %v472
        %984 = vmatprep.subr.mxu0 0.0
        %985 = vmatpush2.msra.mxu0 0.0
        %986 = vmatprep.subr.mxu0 0.0
        %987 = vmatpush2.msra.mxu0 0.0
        %988 = vmatprep.subr.mxu0 0.0
        %989 = vmatpush2.msra.mxu0 0.0
        %990 = vmatprep.subr.mxu0 0.0
        %991 = vmatpush2.msra.mxu0 0.0
        %992 = vmatprep.subr.mxu0 0.0
        %993 = vmatpush2.msra.mxu0 0.0
        %994 = vmatprep.subr.mxu0 0.0
        %995 = vmatpush2.msra.mxu0 0.0
        %996 = vmatprep.subr.mxu0 0.0
        %997 = vmatpush2.msra.mxu0 0.0
        %998 = vmatprep.subr.mxu0 0.0
        %999 = vmatpush2.msra.mxu0 0.0
        %1000 = vmatprep.subr.mxu0 0.0
        %1001 = vmatpush2.msra.mxu0 0.0
        %1002 = vmatprep.subr.mxu0 0.0
        %1003 = vmatpush2.msra.mxu0 0.0
        %1004 = vmatprep.subr.mxu0 0.0
        %1005 = vmatpush2.msra.mxu0 0.0
        %1006 = vmatprep.subr.mxu0 0.0
        %1007 = vmatpush2.msra.mxu0 0.0
        %1008 = vmatprep.subr.mxu0 0.0
        %1009 = vmatpush2.msra.mxu0 0.0
        %1010 = vmatprep.subr.mxu0 0.0
        %1011 = vmatpush2.msra.mxu0 0.0
        %1012 = vmatprep.subr.mxu0 0.0
        %1013 = vmatpush2.msra.mxu0 0.0
        %1014 = vmatprep.subr.mxu0 0.0
        %1015 = vmatpush2.msra.mxu0 0.0
        %1016 = vmatprep.mubr.f32.mxu0 0.0
        %1017 = vmatmul.mubr.f32.gmra.mxu0 %v950
        %v1018 = vpop.f32.mrf.mxu0
        %v1019 = vadd.f32 0.0, %v1018
        %v1020 = vpop.f32.mrf.mxu0
        %1021 = vdwg.mxu0
        %v1022 = vadd.f32 %v948, %v1019
        %v1023 = vtanh.pop %v1022
        %v1024 = vmul.f32 %v1023, %v563
        %v1025 = vsel %vm483, %v1024, 0.0
        %1026 = vadd.xlane.f32.xlu0 %v1025
        %v1027 = vpop.xlane.xlu0 %1026
        %v1028 = vmax.f32 %v936, %v1027
        %v1029 = vsub.f32 %v936, %v1028
        %v1030 = vmul.f32 %v1029, 1.442695
        %v1031 = vpow.pop %v1030
        %v1032 = vsub.f32 %v1027, %v1028
        %v1033 = vmul.f32 %v1032, 1.442695
        %v1034 = vpow.pop %v1033
        %v1035 = vmul.f32 %v1031, %v944
        %v1036 = vadd.f32 %v1035, %v1034
        %v1037 = vmul.f32 %v1031, %v947
        %v1038 = vmul.f32 %v1034, %v1023
        %v1039 = vadd.f32 %v1037, %v1038
        %v1040 = vadd.f32 %v464, %v480
        %v1042 = vsel %vm483, %v1023, 0
        %1044 = vmatprep.subr.mxu0 0.0
        %1045 = vmatpush1.msra.mxu0 0.0
        %1046 = vmatprep.subr.mxu0 0.0
        %1047 = vmatpush1.msra.mxu0 0.0
        %1048 = vmatprep.subr.mxu0 0.0
        %1049 = vmatpush1.msra.mxu0 0.0
        %1050 = vmatprep.subr.mxu0 0.0
        %1051 = vmatpush1.msra.mxu0 0.0
        %1052 = vmatprep.subr.mxu0 0.0
        %1053 = vmatpush1.msra.mxu0 0.0
        %1054 = vmatprep.subr.mxu0 0.0
        %1055 = vmatpush1.msra.mxu0 0.0
        %1056 = vmatprep.subr.mxu0 0.0
        %1057 = vmatpush1.msra.mxu0 0.0
        %1058 = vmatprep.subr.mxu0 0.0
        %1059 = vmatpush1.msra.mxu0 0.0
        %1060 = vmatprep.subr.mxu0 0.0
        %1061 = vmatpush1.msra.mxu0 0.0
        %1062 = vmatprep.subr.mxu0 0.0
        %1063 = vmatpush1.msra.mxu0 0.0
        %1064 = vmatprep.subr.mxu0 0.0
        %1065 = vmatpush1.msra.mxu0 0.0
        %1066 = vmatprep.subr.mxu0 0.0
        %1067 = vmatpush1.msra.mxu0 0.0
        %1068 = vmatprep.subr.mxu0 0.0
        %1069 = vmatpush1.msra.mxu0 0.0
        %1070 = vmatprep.subr.mxu0 0.0
        %1071 = vmatpush1.msra.mxu0 0.0
        %1072 = vmatprep.subr.mxu0 0.0
        %1073 = vmatpush1.msra.mxu0 %v473
        %1074 = vmatprep.subr.mxu0 0.0
        %1075 = vmatpush1.msra.mxu0 %v472
        %1076 = vmatprep.subr.mxu0 0.0
        %1077 = vmatpush2.msra.mxu0 0.0
        %1078 = vmatprep.subr.mxu0 0.0
        %1079 = vmatpush2.msra.mxu0 0.0
        %1080 = vmatprep.subr.mxu0 0.0
        %1081 = vmatpush2.msra.mxu0 0.0
        %1082 = vmatprep.subr.mxu0 0.0
        %1083 = vmatpush2.msra.mxu0 0.0
        %1084 = vmatprep.subr.mxu0 0.0
        %1085 = vmatpush2.msra.mxu0 0.0
        %1086 = vmatprep.subr.mxu0 0.0
        %1087 = vmatpush2.msra.mxu0 0.0
        %1088 = vmatprep.subr.mxu0 0.0
        %1089 = vmatpush2.msra.mxu0 0.0
        %1090 = vmatprep.subr.mxu0 0.0
        %1091 = vmatpush2.msra.mxu0 0.0
        %1092 = vmatprep.subr.mxu0 0.0
        %1093 = vmatpush2.msra.mxu0 0.0
        %1094 = vmatprep.subr.mxu0 0.0
        %1095 = vmatpush2.msra.mxu0 0.0
        %1096 = vmatprep.subr.mxu0 0.0
        %1097 = vmatpush2.msra.mxu0 0.0
        %1098 = vmatprep.subr.mxu0 0.0
        %1099 = vmatpush2.msra.mxu0 0.0
        %1100 = vmatprep.subr.mxu0 0.0
        %1101 = vmatpush2.msra.mxu0 0.0
        %1102 = vmatprep.subr.mxu0 0.0
        %1103 = vmatpush2.msra.mxu0 0.0
        %1104 = vmatprep.subr.mxu0 0.0
        %1105 = vmatpush2.msra.mxu0 0.0
        %1106 = vmatprep.subr.mxu0 0.0
        %1107 = vmatpush2.msra.mxu0 0.0
        %1108 = vmatprep.mubr.f32.mxu0 0.0
        %1109 = vmatmul.mubr.f32.gmra.mxu0 %v1042
        %v1110 = vpop.f32.mrf.mxu0
        %v1111 = vadd.f32 0.0, %v1110
        %v1112 = vpop.f32.mrf.mxu0
        %1113 = vdwg.mxu0
        %v1114 = vadd.f32 %v1040, %v1111
        %v1115 = vtanh.pop %v1114
        %v1116 = vmul.f32 %v1115, %v563
        %v1117 = vsel %vm483, %v1116, 0.0
        %1118 = vadd.xlane.f32.xlu0 %v1117
        %v1119 = vpop.xlane.xlu0 %1118
        %v1120 = vmax.f32 %v1028, %v1119
        %v1121 = vsub.f32 %v1028, %v1120
        %v1122 = vmul.f32 %v1121, 1.442695
        %v1123 = vpow.pop %v1122
        %v1124 = vsub.f32 %v1119, %v1120
        %v1125 = vmul.f32 %v1124, 1.442695
        %v1126 = vpow.pop %v1125
        %v1127 = vmul.f32 %v1123, %v1036
        %v1128 = vadd.f32 %v1127, %v1126
        %v1129 = vmul.f32 %v1123, %v1039
        %v1130 = vmul.f32 %v1126, %v1115
        %v1131 = vadd.f32 %v1129, %v1130
        %v1132 = vadd.f32 %v469, %v480
        %v1134 = vsel %vm483, %v1115, 0
        %1136 = vmatprep.subr.mxu0 0.0
        %1137 = vmatpush1.msra.mxu0 0.0
        %1138 = vmatprep.subr.mxu0 0.0
        %1139 = vmatpush1.msra.mxu0 0.0
        %1140 = vmatprep.subr.mxu0 0.0
        %1141 = vmatpush1.msra.mxu0 0.0
        %1142 = vmatprep.subr.mxu0 0.0
        %1143 = vmatpush1.msra.mxu0 0.0
        %1144 = vmatprep.subr.mxu0 0.0
        %1145 = vmatpush1.msra.mxu0 0.0
        %1146 = vmatprep.subr.mxu0 0.0
        %1147 = vmatpush1.msra.mxu0 0.0
        %1148 = vmatprep.subr.mxu0 0.0
        %1149 = vmatpush1.msra.mxu0 0.0
        %1150 = vmatprep.subr.mxu0 0.0
        %1151 = vmatpush1.msra.mxu0 0.0
        %1152 = vmatprep.subr.mxu0 0.0
        %1153 = vmatpush1.msra.mxu0 0.0
        %1154 = vmatprep.subr.mxu0 0.0
        %1155 = vmatpush1.msra.mxu0 0.0
        %1156 = vmatprep.subr.mxu0 0.0
        %1157 = vmatpush1.msra.mxu0 0.0
        %1158 = vmatprep.subr.mxu0 0.0
        %1159 = vmatpush1.msra.mxu0 0.0
        %1160 = vmatprep.subr.mxu0 0.0
        %1161 = vmatpush1.msra.mxu0 0.0
        %1162 = vmatprep.subr.mxu0 0.0
        %1163 = vmatpush1.msra.mxu0 0.0
        %1164 = vmatprep.subr.mxu0 0.0
        %1165 = vmatpush1.msra.mxu0 %v473
        %1166 = vmatprep.subr.mxu0 0.0
        %1167 = vmatpush1.msra.mxu0 %v472
        %1168 = vmatprep.subr.mxu0 0.0
        %1169 = vmatpush2.msra.mxu0 0.0
        %1170 = vmatprep.subr.mxu0 0.0
        %1171 = vmatpush2.msra.mxu0 0.0
        %1172 = vmatprep.subr.mxu0 0.0
        %1173 = vmatpush2.msra.mxu0 0.0
        %1174 = vmatprep.subr.mxu0 0.0
        %1175 = vmatpush2.msra.mxu0 0.0
        %1176 = vmatprep.subr.mxu0 0.0
        %1177 = vmatpush2.msra.mxu0 0.0
        %1178 = vmatprep.subr.mxu0 0.0
        %1179 = vmatpush2.msra.mxu0 0.0
        %1180 = vmatprep.subr.mxu0 0.0
        %1181 = vmatpush2.msra.mxu0 0.0
        %1182 = vmatprep.subr.mxu0 0.0
        %1183 = vmatpush2.msra.mxu0 0.0
        %1184 = vmatprep.subr.mxu0 0.0
        %1185 = vmatpush2.msra.mxu0 0.0
        %1186 = vmatprep.subr.mxu0 0.0
        %1187 = vmatpush2.msra.mxu0 0.0
        %1188 = vmatprep.subr.mxu0 0.0
        %1189 = vmatpush2.msra.mxu0 0.0
        %1190 = vmatprep.subr.mxu0 0.0
        %1191 = vmatpush2.msra.mxu0 0.0
        %1192 = vmatprep.subr.mxu0 0.0
        %1193 = vmatpush2.msra.mxu0 0.0
        %1194 = vmatprep.subr.mxu0 0.0
        %1195 = vmatpush2.msra.mxu0 0.0
        %1196 = vmatprep.subr.mxu0 0.0
        %1197 = vmatpush2.msra.mxu0 0.0
        %1198 = vmatprep.subr.mxu0 0.0
        %1199 = vmatpush2.msra.mxu0 0.0
        %1200 = vmatprep.mubr.f32.mxu0 0.0
        %1201 = vmatmul.mubr.f32.gmra.mxu0 %v1134
        %v1202 = vpop.f32.mrf.mxu0
        %v1203 = vadd.f32 0.0, %v1202
        %v1204 = vpop.f32.mrf.mxu0
        %1205 = vdwg.mxu0
        %v1206 = vadd.f32 %v1132, %v1203
        %v1207 = vtanh.pop %v1206
        %v1208 = vmul.f32 %v1207, %v563
        %v1209 = vsel %vm483, %v1208, 0.0
        %1210 = vadd.xlane.f32.xlu0 %v1209
        %v1211 = vpop.xlane.xlu0 %1210
        %v1212 = vmax.f32 %v1120, %v1211
        %v1213 = vsub.f32 %v1120, %v1212
        %v1214 = vmul.f32 %v1213, 1.442695
        %v1215 = vpow.pop %v1214
        %v1216 = vsub.f32 %v1211, %v1212
        %v1217 = vmul.f32 %v1216, 1.442695
        %v1218 = vpow.pop %v1217
        %v1219 = vmul.f32 %v1215, %v1128
        %v1220 = vadd.f32 %v1219, %v1218
        %v1221 = vmul.f32 %v1215, %v1131
        %v1222 = vmul.f32 %v1218, %v1207
        %v1223 = vadd.f32 %v1221, %v1222
        %v1224 = vrcp.pop %v1220
        %v1225 = vmul.f32 %v1223, %v1224
        %v1226 = vld [vmem:[%s5] sm:$0xff]
        %v1227 = vld [vmem:[%s5 + $0x8] sm:$0xff]
        %v1228 = vld [vmem:[%s6] sm:$0x1]
        %v1230 = vlaneseq
        %v1231 = vshrl.u32 %v1230, 7
        %v1232 = vsub.s32 0, %v1231
        %v1233 = vrot.slane %v1228, %v1232
        %v1236 = vsel %vm483, %v1225, 0
        %1238 = vmatprep.subr.mxu0 0.0
        %1239 = vmatpush1.msra.mxu0 0.0
        %1240 = vmatprep.subr.mxu0 0.0
        %1241 = vmatpush1.msra.mxu0 0.0
        %1242 = vmatprep.subr.mxu0 0.0
        %1243 = vmatpush1.msra.mxu0 0.0
        %1244 = vmatprep.subr.mxu0 0.0
        %1245 = vmatpush1.msra.mxu0 0.0
        %1246 = vmatprep.subr.mxu0 0.0
        %1247 = vmatpush1.msra.mxu0 0.0
        %1248 = vmatprep.subr.mxu0 0.0
        %1249 = vmatpush1.msra.mxu0 0.0
        %1250 = vmatprep.subr.mxu0 0.0
        %1251 = vmatpush1.msra.mxu0 0.0
        %1252 = vmatprep.subr.mxu0 0.0
        %1253 = vmatpush1.msra.mxu0 0.0
        %1254 = vmatprep.subr.mxu0 0.0
        %1255 = vmatpush1.msra.mxu0 0.0
        %1256 = vmatprep.subr.mxu0 0.0
        %1257 = vmatpush1.msra.mxu0 0.0
        %1258 = vmatprep.subr.mxu0 0.0
        %1259 = vmatpush1.msra.mxu0 0.0
        %1260 = vmatprep.subr.mxu0 0.0
        %1261 = vmatpush1.msra.mxu0 0.0
        %1262 = vmatprep.subr.mxu0 0.0
        %1263 = vmatpush1.msra.mxu0 0.0
        %1264 = vmatprep.subr.mxu0 0.0
        %1265 = vmatpush1.msra.mxu0 0.0
        %1266 = vmatprep.subr.mxu0 0.0
        %1267 = vmatpush1.msra.mxu0 %v1227
        %1268 = vmatprep.subr.mxu0 0.0
        %1269 = vmatpush1.msra.mxu0 %v1226
        %1270 = vmatprep.subr.mxu0 0.0
        %1271 = vmatpush2.msra.mxu0 0.0
        %1272 = vmatprep.subr.mxu0 0.0
        %1273 = vmatpush2.msra.mxu0 0.0
        %1274 = vmatprep.subr.mxu0 0.0
        %1275 = vmatpush2.msra.mxu0 0.0
        %1276 = vmatprep.subr.mxu0 0.0
        %1277 = vmatpush2.msra.mxu0 0.0
        %1278 = vmatprep.subr.mxu0 0.0
        %1279 = vmatpush2.msra.mxu0 0.0
        %1280 = vmatprep.subr.mxu0 0.0
        %1281 = vmatpush2.msra.mxu0 0.0
        %1282 = vmatprep.subr.mxu0 0.0
        %1283 = vmatpush2.msra.mxu0 0.0
        %1284 = vmatprep.subr.mxu0 0.0
        %1285 = vmatpush2.msra.mxu0 0.0
        %1286 = vmatprep.subr.mxu0 0.0
        %1287 = vmatpush2.msra.mxu0 0.0
        %1288 = vmatprep.subr.mxu0 0.0
        %1289 = vmatpush2.msra.mxu0 0.0
        %1290 = vmatprep.subr.mxu0 0.0
        %1291 = vmatpush2.msra.mxu0 0.0
        %1292 = vmatprep.subr.mxu0 0.0
        %1293 = vmatpush2.msra.mxu0 0.0
        %1294 = vmatprep.subr.mxu0 0.0
        %1295 = vmatpush2.msra.mxu0 0.0
        %1296 = vmatprep.subr.mxu0 0.0
        %1297 = vmatpush2.msra.mxu0 0.0
        %1298 = vmatprep.subr.mxu0 0.0
        %1299 = vmatpush2.msra.mxu0 0.0
        %1300 = vmatprep.subr.mxu0 0.0
        %1301 = vmatpush2.msra.mxu0 0.0
        %1302 = vmatprep.mubr.f32.mxu0 0.0
        %1303 = vmatmul.mubr.f32.gmra.mxu0 %v1236
        %v1304 = vpop.f32.mrf.mxu0
        %v1305 = vadd.f32 %v1233, %v1304
        %v1306 = vpop.f32.mrf.mxu0
        %1307 = vdwg.mxu0
        %1308 = vst [vmem:[%s271] sm:$0xff] %v1305
        %s1309 = sand.u32 %s181, 1
        %s1310 = scalar_lea.sflag [#allocation3], %s1309
        %s1311 = sand.u32 %s181, 1
        %s1312 = smul.addr %s1311, 8
        %s1313 = scalar_lea.vmem [#allocation2], %s1312
        // Predicated region
        $region49: #{rnn_with_attention_forward.1} parent=47 // pred_check
          %p1314 = pneg %p191
        $region50: #{rnn_with_attention_forward.1} parent=47 // pred_check_branch
          %1316 = sbr.rel (%p1314) target = $region52
        $region51: #{rnn_with_attention_forward.1} parent=47 // pred_region
          %s1318 = ssub.s32 128, 128
          %1319 = vsyncadd %s1310, %s1318
          %s1320 = smul.addr %s21, 128
          %s1321 = scalar_lea.hbm %s7, %s1320
          %s1323 = sshll.u32 %s1313, 4
          %s1324 = int_to_ptr.vmem [resolvable:$true] %s1323
          %1326 = dma.vmem_to_hbm [thread:$0]  %s1324, 128, %s1321, %s1310
        $region52: #{rnn_with_attention_forward.1} parent=47 // pred_fallthru
          _
      $region48: #{rnn_with_attention_forward.1} parent=5 // pred_fallthru
        _
      %p1327 = scmp.le.s32.totalorder 2, %s16
      // Predicated region
      $region53: #{rnn_with_attention_forward.1} parent=5 // pred_check
        %p1328 = pneg %p1327
      $region54: #{rnn_with_attention_forward.1} parent=5 // pred_check_branch
        %1330 = sbr.rel (%p1328) target = $region56
      $region55: #{rnn_with_attention_forward.1} parent=5 // pred_region
        %s1331 = ssub.s32 %s16, 2
        // Predicated region
        $region57: #{rnn_with_attention_forward.1} parent=55 // pred_check
          %p1332 = pneg %p197
        $region58: #{rnn_with_attention_forward.1} parent=55 // pred_check_branch
          %1334 = sbr.rel (%p1332) target = $region60
        $region59: #{rnn_with_attention_forward.1} parent=55 // pred_region
          %s1335 = sand.u32 %s182, 1
          %s1336 = scalar_lea.sflag [#allocation3], %s1335
          %s1337 = sand.u32 %s182, 1
          %s1338 = smul.addr %s1337, 8
          %s1339 = scalar_lea.vmem [#allocation2], %s1338
          %1340 = dma.done %s1336, 128
        $region60: #{rnn_with_attention_forward.1} parent=55 // pred_fallthru
          _
      $region56: #{rnn_with_attention_forward.1} parent=5 // pred_fallthru
        _
    $region6: #{rnn_with_attention_forward.1} parent=1 // loop_footer
      %s20 = sadd.s32 1, %s16
    $region7: #{rnn_with_attention_forward.1} parent=1 // loop_footer_branch
      %15 = sbr.rel target = $region3
    $region8: #{rnn_with_attention_forward.1} parent=1 // loop_exit
      _
    %1341 = vsyncpa [#allocation3], 1
    %s1342 = scalar_lea.sflag [#allocation3], 1
    %1343 = vsyncpa %s1342, 1

</llo_original>
